<compile_context>
chip_gen: v6e
topology: v6e:2x2x1
jax: 0.10.0
libtpu: 0.0.40
codegen_flags: <defaults>
</compile_context>

<pallas_src>
import jax
import jax.numpy as jnp
from jax.experimental import pallas as pl
from jax.experimental.pallas import tpu as pltpu

LANE = 128


def _round_up(n, m):
    return ((n + m - 1) // m) * m


# ----------------------------------------------------------------------------
# Kernel: one batch tile (TB, Dp) through the whole 6-layer MLP.
# x_ref : (TB, Dp)      f32   activations (lane-padded)
# w_ref : (6, Dp, Dp)   bf16  weights, stored (in, out), zero-padded
# b_ref : (6, 1, Dp)    f32   biases, zero-padded
# dec_ref, enc_ref : (TB, Dp) f32 lane-dense output slabs
# ----------------------------------------------------------------------------
def autoencoder_kernel(x_ref, w_ref, b_ref, dec_ref, enc_ref):
    def dense(h, layer, relu):
        # bf16 MXU operands, f32 accumulation; elementwise stays f32.
        y = jnp.dot(h.astype(jnp.bfloat16), w_ref[layer],
                    preferred_element_type=jnp.float32)
        y = y + b_ref[layer]                       # (1, Dp) broadcast
        if relu:
            y = jnp.maximum(y, 0.0)
        return y

    # ----- encoder -----
    h = dense(x_ref[...], 0, relu=True)
    h = dense(h, 1, relu=True)
    enc = dense(h, 2, relu=False)
    enc_ref[...] = enc.astype(enc_ref.dtype)

    # ----- decoder -----
    d = dense(enc, 3, relu=True)
    d = dense(d, 4, relu=True)
    d = dense(d, 5, relu=False)
    # sigmoid = 1 / (1 + exp(-x)): exp on EUP, approximate reciprocal on EUP.
    dec = pl.reciprocal(1.0 + jnp.exp(-d), approx=True)
    dec_ref[...] = dec.astype(dec_ref.dtype)


# ----------------------------------------------------------------------------
# Wrapper
# ----------------------------------------------------------------------------
def pack_params(params):
    """Pad every layer to a common (Dp, Dp) lane-dense slab and stack."""
    dims = [(w.shape[0], w.shape[1]) for w, _ in params]
    dp = max(_round_up(max(d), LANE) for d in dims)
    n = len(params)
    w_stack = jnp.zeros((n, dp, dp), jnp.bfloat16)
    b_stack = jnp.zeros((n, 1, dp), jnp.float32)
    for i, (w, b) in enumerate(params):
        w_stack = w_stack.at[i, : w.shape[0], : w.shape[1]].set(
            w.astype(jnp.bfloat16))
        b_stack = b_stack.at[i, 0, : b.shape[0]].set(b.astype(jnp.float32))
    return w_stack, b_stack, dp, dims


def autoencoder_forward(x, params, *, tb=128):
    """x: (B, input_dim) f32. params: list of 6 (W(in,out), b(out,)) pairs."""
    B, input_dim = x.shape
    latent_dim = params[2][0].shape[1]
    n_layers = len(params)

    w_stack, b_stack, dp, dims = pack_params(params)

    n_tiles = pl.cdiv(B, tb)
    bp = n_tiles * tb

    # Lane-dense, batch-padded input slab.
    xp = jnp.zeros((bp, dp), jnp.float32).at[:B, :input_dim].set(x)

    flops = 2 * bp * n_layers * dp * dp
    bytes_accessed = (bp * dp * 4            # x
                      + n_layers * dp * dp * 2   # bf16 weights
                      + n_layers * dp * 4        # biases
                      + 2 * bp * dp * 4)         # two outputs

    dec_pad, enc_pad = pl.pallas_call(
        autoencoder_kernel,
        grid=(n_tiles,),
        in_specs=[
            pl.BlockSpec((tb, dp), lambda i: (i, 0)),                # x tile
            pl.BlockSpec((n_layers, dp, dp), lambda i: (0, 0, 0)),   # weights (resident)
            pl.BlockSpec((n_layers, 1, dp), lambda i: (0, 0, 0)),    # biases  (resident)
        ],
        out_specs=(
            pl.BlockSpec((tb, dp), lambda i: (i, 0)),
            pl.BlockSpec((tb, dp), lambda i: (i, 0)),
        ),
        out_shape=(
            jax.ShapeDtypeStruct((bp, dp), jnp.float32),  # decoded (padded)
            jax.ShapeDtypeStruct((bp, dp), jnp.float32),  # encoded (padded)
        ),
        compiler_params=pltpu.CompilerParams(
            dimension_semantics=("parallel",)),
        cost_estimate=pl.CostEstimate(
            flops=flops, transcendentals=bp * dp, bytes_accessed=bytes_accessed),
    )(xp, w_stack, b_stack)

    decoded = dec_pad[:B, :input_dim]
    encoded = enc_pad[:B, :latent_dim]
    return decoded, encoded


# ----------------------------------------------------------------------------
# Init + reference
# ----------------------------------------------------------------------------
def init_params(key, input_dim, hidden_dim):
    """Weights stored (in, out) f32 (transposed vs nn.Linear); biases (out,)."""
    dims = [
        (input_dim, hidden_dim),             # encoder L1
        (hidden_dim, hidden_dim // 2),       # encoder L2
        (hidden_dim // 2, hidden_dim // 4),  # encoder L3 (latent)
        (hidden_dim // 4, hidden_dim // 2),  # decoder L1
        (hidden_dim // 2, hidden_dim),       # decoder L2
        (hidden_dim, input_dim),             # decoder L3
    ]
    params = []
    for i, (din, dout) in enumerate(dims):
        kw, kb = jax.random.split(jax.random.fold_in(key, i))
        bound = 1.0 / jnp.sqrt(din)
        w = jax.random.uniform(kw, (din, dout), jnp.float32, -bound, bound)
        b = jax.random.uniform(kb, (dout,), jnp.float32, -bound, bound)
        params.append((w, b))
    return params


def reference_forward(x, params):
    """Pure-JAX reference with the same bf16-operand / f32-accumulate policy."""
    def dense(h, w, b):
        return jnp.dot(h.astype(jnp.bfloat16), w.astype(jnp.bfloat16),
                       preferred_element_type=jnp.float32) + b

    (w1, b1), (w2, b2), (w3, b3), (w4, b4), (w5, b5), (w6, b6) = params
    h = jnp.maximum(dense(x, w1, b1), 0.0)
    h = jnp.maximum(dense(h, w2, b2), 0.0)
    enc = dense(h, w3, b3)
    d = jnp.maximum(dense(enc, w4, b4), 0.0)
    d = jnp.maximum(dense(d, w5, b5), 0.0)
    dec = jax.nn.sigmoid(dense(d, w6, b6))
    return dec, enc


if __name__ == "__main__":
    batch = 256          # 2 batch tiles of 128 -> exercises the parallel grid
    input_dim = 64
    hidden_dim = 128     # matches the PyTorch spec; latent = hidden_dim // 4 = 32

    key = jax.random.PRNGKey(0)
    kx, kp = jax.random.split(key)
    x = jax.random.uniform(kx, (batch, input_dim), jnp.float32)
    params = init_params(kp, input_dim, hidden_dim)

    decoded, encoded = autoencoder_forward(x, params, tb=128)
    jax.block_until_ready((decoded, encoded))

    ref_dec, ref_enc = reference_forward(x, params)

    assert decoded.shape == (batch, input_dim)
    assert encoded.shape == (batch, hidden_dim // 4)
    # encoded: pure bf16-matmul path, only accumulation-order differences.
    assert jnp.allclose(encoded, ref_enc, atol=1e-3, rtol=1e-3)
    # decoded: additionally goes through the approximate EUP reciprocal.
    assert jnp.allclose(decoded, ref_dec, atol=1e-2, rtol=1e-2)

    print("KERNEL_OK")
</pallas_src>

<mosaic_0001>
module attributes {stable_mosaic.version = 11 : i64} {
  func.func @autoencoder_kernel(%arg0: i32, %arg1: memref<128x128xf32, #tpu.memory_space<vmem>>, %arg2: memref<6x128x128xbf16, #tpu.memory_space<vmem>>, %arg3: memref<6x1x128xf32, #tpu.memory_space<vmem>>, %arg4: memref<128x128xf32, #tpu.memory_space<vmem>>, %arg5: memref<128x128xf32, #tpu.memory_space<vmem>>) attributes {dimension_semantics = [#tpu.dimension_semantics<parallel>], iteration_bounds = array<i64: 2>, scalar_prefetch = 0 : i64, scratch_operands = 0 : i64, tpu.core_type = #tpu.core_type<tc>, window_params = [{transform_indices = @transform_0, window_bounds = array<i64: 128, 128>}, {pipeline_mode = #tpu.pipeline_mode<synchronous>, transform_indices = @transform_1, window_bounds = array<i64: 6, 128, 128>}, {pipeline_mode = #tpu.pipeline_mode<synchronous>, transform_indices = @transform_2, window_bounds = array<i64: 6, 1, 128>}, {transform_indices = @transform_3, window_bounds = array<i64: 128, 128>}, {transform_indices = @transform_4, window_bounds = array<i64: 128, 128>}]} {
    %c0 = arith.constant 0 : index
    %c0_0 = arith.constant 0 : index
    %0 = vector.load %arg1[%c0, %c0_0] : memref<128x128xf32, #tpu.memory_space<vmem>>, vector<128x128xf32>
    %1 = arith.truncf %0 : vector<128x128xf32> to vector<128x128xbf16>
    %c0_1 = arith.constant 0 : index
    %c0_2 = arith.constant 0 : index
    %c0_3 = arith.constant 0 : index
    %2 = vector.load %arg2[%c0_1, %c0_2, %c0_3] : memref<6x128x128xbf16, #tpu.memory_space<vmem>>, vector<1x128x128xbf16>
    %3 = vector.shape_cast %2 : vector<1x128x128xbf16> to vector<128x128xbf16>
    %cst = arith.constant dense<0.000000e+00> : vector<128x128xf32>
    %4 = tpu.matmul %1, %3, %cst {dimension_numbers = #tpu.dot_dimension_numbers<[1], [0], [0], [1], [0, 0, 1, 1], [], []>} : vector<128x128xbf16>, vector<128x128xbf16>, vector<128x128xf32> -> vector<128x128xf32>
    %c0_4 = arith.constant 0 : index
    %c0_5 = arith.constant 0 : index
    %c0_6 = arith.constant 0 : index
    %5 = vector.load %arg3[%c0_4, %c0_5, %c0_6] : memref<6x1x128xf32, #tpu.memory_space<vmem>>, vector<1x1x128xf32>
    %6 = vector.shape_cast %5 : vector<1x1x128xf32> to vector<1x128xf32>
    %7 = vector.broadcast %6 : vector<1x128xf32> to vector<128x128xf32>
    %8 = arith.addf %4, %7 : vector<128x128xf32>
    %cst_7 = arith.constant 0.000000e+00 : f32
    %9 = vector.broadcast %cst_7 : f32 to vector<128x128xf32>
    %10 = arith.maximumf %8, %9 : vector<128x128xf32>
    %11 = arith.truncf %10 : vector<128x128xf32> to vector<128x128xbf16>
    %c1 = arith.constant 1 : index
    %c0_8 = arith.constant 0 : index
    %c0_9 = arith.constant 0 : index
    %12 = vector.load %arg2[%c1, %c0_8, %c0_9] : memref<6x128x128xbf16, #tpu.memory_space<vmem>>, vector<1x128x128xbf16>
    %13 = vector.shape_cast %12 : vector<1x128x128xbf16> to vector<128x128xbf16>
    %cst_10 = arith.constant dense<0.000000e+00> : vector<128x128xf32>
    %14 = tpu.matmul %11, %13, %cst_10 {dimension_numbers = #tpu.dot_dimension_numbers<[1], [0], [0], [1], [0, 0, 1, 1], [], []>} : vector<128x128xbf16>, vector<128x128xbf16>, vector<128x128xf32> -> vector<128x128xf32>
    %c1_11 = arith.constant 1 : index
    %c0_12 = arith.constant 0 : index
    %c0_13 = arith.constant 0 : index
    %15 = vector.load %arg3[%c1_11, %c0_12, %c0_13] : memref<6x1x128xf32, #tpu.memory_space<vmem>>, vector<1x1x128xf32>
    %16 = vector.shape_cast %15 : vector<1x1x128xf32> to vector<1x128xf32>
    %17 = vector.broadcast %16 : vector<1x128xf32> to vector<128x128xf32>
    %18 = arith.addf %14, %17 : vector<128x128xf32>
    %cst_14 = arith.constant 0.000000e+00 : f32
    %19 = vector.broadcast %cst_14 : f32 to vector<128x128xf32>
    %20 = arith.maximumf %18, %19 : vector<128x128xf32>
    %21 = arith.truncf %20 : vector<128x128xf32> to vector<128x128xbf16>
    %c2 = arith.constant 2 : index
    %c0_15 = arith.constant 0 : index
    %c0_16 = arith.constant 0 : index
    %22 = vector.load %arg2[%c2, %c0_15, %c0_16] : memref<6x128x128xbf16, #tpu.memory_space<vmem>>, vector<1x128x128xbf16>
    %23 = vector.shape_cast %22 : vector<1x128x128xbf16> to vector<128x128xbf16>
    %cst_17 = arith.constant dense<0.000000e+00> : vector<128x128xf32>
    %24 = tpu.matmul %21, %23, %cst_17 {dimension_numbers = #tpu.dot_dimension_numbers<[1], [0], [0], [1], [0, 0, 1, 1], [], []>} : vector<128x128xbf16>, vector<128x128xbf16>, vector<128x128xf32> -> vector<128x128xf32>
    %c2_18 = arith.constant 2 : index
    %c0_19 = arith.constant 0 : index
    %c0_20 = arith.constant 0 : index
    %25 = vector.load %arg3[%c2_18, %c0_19, %c0_20] : memref<6x1x128xf32, #tpu.memory_space<vmem>>, vector<1x1x128xf32>
    %26 = vector.shape_cast %25 : vector<1x1x128xf32> to vector<1x128xf32>
    %27 = vector.broadcast %26 : vector<1x128xf32> to vector<128x128xf32>
    %28 = arith.addf %24, %27 : vector<128x128xf32>
    %c0_21 = arith.constant 0 : index
    %c0_22 = arith.constant 0 : index
    %29 = vector.load %arg5[%c0_21, %c0_22] : memref<128x128xf32, #tpu.memory_space<vmem>>, vector<128x128xf32>
    tpu.vector_store %arg5[%c0_21, %c0_22], %28 {strides = array<i32>} : memref<128x128xf32, #tpu.memory_space<vmem>>, vector<128x128xf32>,
    %30 = arith.truncf %28 : vector<128x128xf32> to vector<128x128xbf16>
    %c3 = arith.constant 3 : index
    %c0_23 = arith.constant 0 : index
    %c0_24 = arith.constant 0 : index
    %31 = vector.load %arg2[%c3, %c0_23, %c0_24] : memref<6x128x128xbf16, #tpu.memory_space<vmem>>, vector<1x128x128xbf16>
    %32 = vector.shape_cast %31 : vector<1x128x128xbf16> to vector<128x128xbf16>
    %cst_25 = arith.constant dense<0.000000e+00> : vector<128x128xf32>
    %33 = tpu.matmul %30, %32, %cst_25 {dimension_numbers = #tpu.dot_dimension_numbers<[1], [0], [0], [1], [0, 0, 1, 1], [], []>} : vector<128x128xbf16>, vector<128x128xbf16>, vector<128x128xf32> -> vector<128x128xf32>
    %c3_26 = arith.constant 3 : index
    %c0_27 = arith.constant 0 : index
    %c0_28 = arith.constant 0 : index
    %34 = vector.load %arg3[%c3_26, %c0_27, %c0_28] : memref<6x1x128xf32, #tpu.memory_space<vmem>>, vector<1x1x128xf32>
    %35 = vector.shape_cast %34 : vector<1x1x128xf32> to vector<1x128xf32>
    %36 = vector.broadcast %35 : vector<1x128xf32> to vector<128x128xf32>
    %37 = arith.addf %33, %36 : vector<128x128xf32>
    %cst_29 = arith.constant 0.000000e+00 : f32
    %38 = vector.broadcast %cst_29 : f32 to vector<128x128xf32>
    %39 = arith.maximumf %37, %38 : vector<128x128xf32>
    %40 = arith.truncf %39 : vector<128x128xf32> to vector<128x128xbf16>
    %c4 = arith.constant 4 : index
    %c0_30 = arith.constant 0 : index
    %c0_31 = arith.constant 0 : index
    %41 = vector.load %arg2[%c4, %c0_30, %c0_31] : memref<6x128x128xbf16, #tpu.memory_space<vmem>>, vector<1x128x128xbf16>
    %42 = vector.shape_cast %41 : vector<1x128x128xbf16> to vector<128x128xbf16>
    %cst_32 = arith.constant dense<0.000000e+00> : vector<128x128xf32>
    %43 = tpu.matmul %40, %42, %cst_32 {dimension_numbers = #tpu.dot_dimension_numbers<[1], [0], [0], [1], [0, 0, 1, 1], [], []>} : vector<128x128xbf16>, vector<128x128xbf16>, vector<128x128xf32> -> vector<128x128xf32>
    %c4_33 = arith.constant 4 : index
    %c0_34 = arith.constant 0 : index
    %c0_35 = arith.constant 0 : index
    %44 = vector.load %arg3[%c4_33, %c0_34, %c0_35] : memref<6x1x128xf32, #tpu.memory_space<vmem>>, vector<1x1x128xf32>
    %45 = vector.shape_cast %44 : vector<1x1x128xf32> to vector<1x128xf32>
    %46 = vector.broadcast %45 : vector<1x128xf32> to vector<128x128xf32>
    %47 = arith.addf %43, %46 : vector<128x128xf32>
    %cst_36 = arith.constant 0.000000e+00 : f32
    %48 = vector.broadcast %cst_36 : f32 to vector<128x128xf32>
    %49 = arith.maximumf %47, %48 : vector<128x128xf32>
    %50 = arith.truncf %49 : vector<128x128xf32> to vector<128x128xbf16>
    %c5 = arith.constant 5 : index
    %c0_37 = arith.constant 0 : index
    %c0_38 = arith.constant 0 : index
    %51 = vector.load %arg2[%c5, %c0_37, %c0_38] : memref<6x128x128xbf16, #tpu.memory_space<vmem>>, vector<1x128x128xbf16>
    %52 = vector.shape_cast %51 : vector<1x128x128xbf16> to vector<128x128xbf16>
    %cst_39 = arith.constant dense<0.000000e+00> : vector<128x128xf32>
    %53 = tpu.matmul %50, %52, %cst_39 {dimension_numbers = #tpu.dot_dimension_numbers<[1], [0], [0], [1], [0, 0, 1, 1], [], []>} : vector<128x128xbf16>, vector<128x128xbf16>, vector<128x128xf32> -> vector<128x128xf32>
    %c5_40 = arith.constant 5 : index
    %c0_41 = arith.constant 0 : index
    %c0_42 = arith.constant 0 : index
    %54 = vector.load %arg3[%c5_40, %c0_41, %c0_42] : memref<6x1x128xf32, #tpu.memory_space<vmem>>, vector<1x1x128xf32>
    %55 = vector.shape_cast %54 : vector<1x1x128xf32> to vector<1x128xf32>
    %56 = vector.broadcast %55 : vector<1x128xf32> to vector<128x128xf32>
    %57 = arith.addf %53, %56 : vector<128x128xf32>
    %cst_43 = arith.constant 0.000000e+00 : f32
    %58 = vector.broadcast %cst_43 : f32 to vector<128x128xf32>
    %59 = arith.subf %58, %57 : vector<128x128xf32>
    %60 = math.exp %59 : vector<128x128xf32>
    %cst_44 = arith.constant 1.000000e+00 : f32
    %61 = vector.broadcast %cst_44 : f32 to vector<128x128xf32>
    %62 = arith.addf %61, %60 : vector<128x128xf32>
    %63 = tpu.reciprocal %62 {approx = true} : vector<128x128xf32> -> vector<128x128xf32>
    %c0_45 = arith.constant 0 : index
    %c0_46 = arith.constant 0 : index
    %64 = vector.load %arg4[%c0_45, %c0_46] : memref<128x128xf32, #tpu.memory_space<vmem>>, vector<128x128xf32>
    tpu.vector_store %arg4[%c0_45, %c0_46], %63 {strides = array<i32>} : memref<128x128xf32, #tpu.memory_space<vmem>>, vector<128x128xf32>,
    return
  }
  func.func @transform_0(%arg0: i32) -> (i32, i32) {
    %c0_i32 = arith.constant 0 : i32
    %c0_i32_0 = arith.constant 0 : i32
    return %arg0, %c0_i32 : i32, i32
  }
  func.func @transform_1(%arg0: i32) -> (i32, i32, i32) {
    %c0_i32 = arith.constant 0 : i32
    %c0_i32_0 = arith.constant 0 : i32
    %c0_i32_1 = arith.constant 0 : i32
    %c0_i32_2 = arith.constant 0 : i32
    return %c0_i32, %c0_i32_0, %c0_i32_1 : i32, i32, i32
  }
  func.func @transform_2(%arg0: i32) -> (i32, i32, i32) {
    %c0_i32 = arith.constant 0 : i32
    %c0_i32_0 = arith.constant 0 : i32
    %c0_i32_1 = arith.constant 0 : i32
    %c0_i32_2 = arith.constant 0 : i32
    return %c0_i32, %c0_i32_0, %c0_i32_1 : i32, i32, i32
  }
  func.func @transform_3(%arg0: i32) -> (i32, i32) {
    %c0_i32 = arith.constant 0 : i32
    %c0_i32_0 = arith.constant 0 : i32
    return %arg0, %c0_i32 : i32, i32
  }
  func.func @transform_4(%arg0: i32) -> (i32, i32) {
    %c0_i32 = arith.constant 0 : i32
    %c0_i32_0 = arith.constant 0 : i32
    return %arg0, %c0_i32 : i32, i32
  }
}

</mosaic_0001>

<llo_original>
// kernel: tpu_custom_call.1
$region0: #{tpu_custom_call.1}
  #allocation0 [shape = 'u32[]', space=smem, size = 0x4, offset = 0x4, fixed_abs, tag = 'smem constant byte address 0x4 - core index']
  #allocation1 [shape = 'u32[144,128]{1,0:T(1,128)}', space=vmem, size = 0x12000, scoped, tag = 'internal scratch']
  %s0 = inlined_call_operand.hbm [shape: f32[256,128], index: 0, kind: input, shape index: {}]
  %s1 = inlined_call_operand.hbm [shape: bf16[6,128,128], index: 1, kind: input, shape index: {}]
  %s2 = inlined_call_operand.hbm [shape: f32[6,1,128], index: 2, kind: input, shape index: {}]
  %s3 = inlined_call_operand.hbm [shape: f32[256,128], index: 3, kind: output, shape index: {0}]
  %s4 = inlined_call_operand.hbm [shape: f32[256,128], index: 4, kind: output, shape index: {1}]
  %5 = xla_tuple %s3, %s4
  %s6 = sld [smem:[#allocation0]]
  $region65: #{tpu_custom_call.1} parent=0
    _
  %s8 = ssub.s32 1, %s6
  %s9 = scalar_select 0, %s8, %s6
  $region1: #{tpu_custom_call.1} parent=0
    #allocation2 [shape = 'u8[131072]{0}', space=vmem, size = 0x20000, scoped, tag = 'input window, operand 0']
    #allocation3 [shape = 's32[2]{0}', space=sflag, size = 0x8, scoped, tag = 'scoped memory for tpu_custom_call.1']
    #allocation4 [shape = 's32[2]{0}', space=sflag, size = 0x8, scoped, tag = 'scoped memory for tpu_custom_call.1']
    #allocation5 [shape = 'u8[196608]{0}', space=vmem, size = 0x30000, scoped, tag = 'input window, operand 1, single buffered']
    #allocation6 [shape = 's32[1]{0}', space=sflag, size = 0x4, scoped, tag = 'scoped memory for tpu_custom_call.1']
    #allocation7 [shape = 'u8[3072]{0}', space=vmem, size = 0xc00, scoped, tag = 'input window, operand 2, single buffered']
    #allocation8 [shape = 'u8[131072]{0}', space=vmem, size = 0x20000, scoped, tag = 'output window, operand 0']
    #allocation9 [shape = 'u8[131072]{0}', space=vmem, size = 0x20000, scoped, tag = 'output window, operand 1']
    #allocation10 [shape = 's32[2]{0}', space=sflag, size = 0x8, scoped, tag = 'scoped memory for tpu_custom_call.1']
    %10 = vsyncpa [#allocation3], 0
    %s11 = scalar_lea.sflag [#allocation3], 1
    %12 = vsyncpa %s11, 0
    %13 = vsyncpa [#allocation6], 0
    %14 = vsyncpa [#allocation4], 0
    %s15 = scalar_lea.sflag [#allocation4], 1
    %16 = vsyncpa %s15, 0
    %17 = vsyncpa [#allocation10], 0
    %s18 = scalar_lea.sflag [#allocation10], 1
    %19 = vsyncpa %s18, 0
    loop: start=0, step=1, limit=4
    $region2: #{tpu_custom_call.1} parent=1 // loop_pre_header
      _
    $region3: #{tpu_custom_call.1} parent=1 // loop_header
      %s21 = sphi 0, %s25
      %p22 = scmp.ge.s32.totalorder %s21, 4
      %s31 = sphi 0, %s33
      %s34 = sphi 0, %s31
      %s35 = sphi 0, %s34
      %s51 = sphi 0, %s35
      %s55 = sphi 0, %s55
      %s57 = sphi 0, %s55
      %s58 = sphi 0, %s57
      %s72 = sphi 0, %s58
      %s76 = sphi 0, %s76
      %s78 = sphi 0, %s76
      %s79 = sphi 0, %s78
      %s93 = sphi 0, %s79
      %s99 = sphi 0, %s101
      %s102 = sphi 0, %s99
      %s103 = sphi 0, %s102
      %s119 = sphi 0, %s103
      %s125 = sphi 0, %s127
      %s128 = sphi 0, %s125
      %s129 = sphi 0, %s128
      %s145 = sphi 0, %s129
    $region4: #{tpu_custom_call.1} parent=1 // loop_header_branch
      %24 = sbr.rel (%p22) target = $region8
    $region5: #{tpu_custom_call.1} parent=1 // loop_body
      %s26 = ssub.s32 %s21, 1
      %s27 = ssub.s32 %s21, 2
      %s28 = sadd.s32 %s21, 1
      %s29 = ssub.s32 %s21, %s28
      %p30 = scmp.eq.s32.totalorder %s29, 0
      %s32 = sadd.s32 %s31, 1
      %s33 = scalar_select %p30, %s31, %s32
      %p36 = pneg %p30
      %p37 = scmp.eq.s32.totalorder %s21, 1
      %p38 = por %p36, %p37
      %p39 = scmp.ne.s32.totalorder %s31, %s34
      %p40 = scmp.eq.s32.totalorder %s21, 0
      %p41 = por %p39, %p40
      %p42 = scmp.ne.s32.totalorder %s31, %s34
      %p43 = scmp.eq.s32.totalorder %s26, 1
      %p44 = por %p42, %p43
      %p45 = scmp.ne.s32.totalorder %s34, %s35
      %p46 = scmp.eq.s32.totalorder %s26, 0
      %p47 = por %p45, %p46
      %p48 = scmp.ne.s32.totalorder %s34, %s35
      %p49 = scmp.eq.s32.totalorder %s27, 1
      %p50 = por %p48, %p49
      %p52 = scmp.ne.s32.totalorder %s35, %s51
      %p53 = scmp.eq.s32.totalorder %s27, 0
      %p54 = por %p52, %p53
      %s56 = sadd.s32 %s55, 1
      %p59 = scmp.eq.s32.totalorder %s21, 1
      %p60 = scmp.ne.s32.totalorder %s55, %s57
      %p61 = scmp.eq.s32.totalorder %s21, 0
      %p62 = por %p60, %p61
      %p63 = scmp.ne.s32.totalorder %s55, %s57
      %p64 = scmp.eq.s32.totalorder %s26, 1
      %p65 = por %p63, %p64
      %p66 = scmp.ne.s32.totalorder %s57, %s58
      %p67 = scmp.eq.s32.totalorder %s26, 0
      %p68 = por %p66, %p67
      %p69 = scmp.ne.s32.totalorder %s57, %s58
      %p70 = scmp.eq.s32.totalorder %s27, 1
      %p71 = por %p69, %p70
      %p73 = scmp.ne.s32.totalorder %s58, %s72
      %p74 = scmp.eq.s32.totalorder %s27, 0
      %p75 = por %p73, %p74
      %s77 = sadd.s32 %s76, 1
      %p80 = scmp.eq.s32.totalorder %s21, 1
      %p81 = scmp.ne.s32.totalorder %s76, %s78
      %p82 = scmp.eq.s32.totalorder %s21, 0
      %p83 = por %p81, %p82
      %p84 = scmp.ne.s32.totalorder %s76, %s78
      %p85 = scmp.eq.s32.totalorder %s26, 1
      %p86 = por %p84, %p85
      %p87 = scmp.ne.s32.totalorder %s78, %s79
      %p88 = scmp.eq.s32.totalorder %s26, 0
      %p89 = por %p87, %p88
      %p90 = scmp.ne.s32.totalorder %s78, %s79
      %p91 = scmp.eq.s32.totalorder %s27, 1
      %p92 = por %p90, %p91
      %p94 = scmp.ne.s32.totalorder %s79, %s93
      %p95 = scmp.eq.s32.totalorder %s27, 0
      %p96 = por %p94, %p95
      %s97 = ssub.s32 %s21, %s28
      %p98 = scmp.eq.s32.totalorder %s97, 0
      %s100 = sadd.s32 %s99, 1
      %s101 = scalar_select %p98, %s99, %s100
      %p104 = pneg %p98
      %p105 = scmp.eq.s32.totalorder %s21, 1
      %p106 = por %p104, %p105
      %p107 = scmp.ne.s32.totalorder %s99, %s102
      %p108 = scmp.eq.s32.totalorder %s21, 0
      %p109 = por %p107, %p108
      %p110 = scmp.ne.s32.totalorder %s99, %s102
      %p111 = scmp.eq.s32.totalorder %s26, 1
      %p112 = por %p110, %p111
      %p113 = scmp.ne.s32.totalorder %s102, %s103
      %p114 = scmp.eq.s32.totalorder %s26, 0
      %p115 = por %p113, %p114
      %p116 = scmp.ne.s32.totalorder %s102, %s103
      %p117 = scmp.eq.s32.totalorder %s27, 1
      %p118 = por %p116, %p117
      %p120 = scmp.ne.s32.totalorder %s103, %s119
      %p121 = scmp.eq.s32.totalorder %s27, 0
      %p122 = por %p120, %p121
      %s123 = ssub.s32 %s21, %s28
      %p124 = scmp.eq.s32.totalorder %s123, 0
      %s126 = sadd.s32 %s125, 1
      %s127 = scalar_select %p124, %s125, %s126
      %p130 = pneg %p124
      %p131 = scmp.eq.s32.totalorder %s21, 1
      %p132 = por %p130, %p131
      %p133 = scmp.ne.s32.totalorder %s125, %s128
      %p134 = scmp.eq.s32.totalorder %s21, 0
      %p135 = por %p133, %p134
      %p136 = scmp.ne.s32.totalorder %s125, %s128
      %p137 = scmp.eq.s32.totalorder %s26, 1
      %p138 = por %p136, %p137
      %p139 = scmp.ne.s32.totalorder %s128, %s129
      %p140 = scmp.eq.s32.totalorder %s26, 0
      %p141 = por %p139, %p140
      %p142 = scmp.ne.s32.totalorder %s128, %s129
      %p143 = scmp.eq.s32.totalorder %s27, 1
      %p144 = por %p142, %p143
      %p146 = scmp.ne.s32.totalorder %s129, %s145
      %p147 = scmp.eq.s32.totalorder %s27, 0
      %p148 = por %p146, %p147
      %p149 = scmp.le.s32.totalorder 1, %s21
      %p150 = scmp.lt.s32.totalorder %s21, 3
      %p151 = pnand %p149, %p150
      %p152 = pneg %p151
      // Predicated region
      $region9: #{tpu_custom_call.1} parent=5 // pred_check
        _
      $region10: #{tpu_custom_call.1} parent=5 // pred_check_branch
        %154 = sbr.rel (%p151) target = $region12
      $region11: #{tpu_custom_call.1} parent=5 // pred_region
        %s155 = ssub.s32 %s21, 1
        // Predicated region
        $region13: #{tpu_custom_call.1} parent=11 // pred_check
          %p156 = pneg %p68
        $region14: #{tpu_custom_call.1} parent=11 // pred_check_branch
          %158 = sbr.rel (%p156) target = $region16
        $region15: #{tpu_custom_call.1} parent=11 // pred_region
          %s160 = ssub.s32 6144, 6144
          %161 = vsyncadd [#allocation6], %s160
          %s162 = sshll.u32 [#allocation5], 4
          %s163 = int_to_ptr.vmem [resolvable:$true] %s162
          %168 = dma.hbm_to_vmem [thread:$0]  %s1, 6144, %s163, [#allocation6], 64, 64, 4
        $region16: #{tpu_custom_call.1} parent=11 // pred_fallthru
          _
        // Predicated region
        $region17: #{tpu_custom_call.1} parent=11 // pred_check
          %p169 = pneg %p89
        $region18: #{tpu_custom_call.1} parent=11 // pred_check_branch
          %171 = sbr.rel (%p169) target = $region20
        $region19: #{tpu_custom_call.1} parent=11 // pred_region
          %s173 = ssub.s32 96, 96
          %174 = vsyncadd [#allocation6], %s173
          %s175 = sshll.u32 [#allocation7], 4
          %s176 = int_to_ptr.vmem [resolvable:$true] %s175
          %181 = dma.hbm_to_vmem [thread:$0]  %s2, 96, %s176, [#allocation6], 16, 16, 1
        $region20: #{tpu_custom_call.1} parent=11 // pred_fallthru
          _
      $region12: #{tpu_custom_call.1} parent=5 // pred_fallthru
        _
      %p182 = scmp.lt.s32.totalorder %s21, 2
      // Predicated region
      $region21: #{tpu_custom_call.1} parent=5 // pred_check
        %p183 = pneg %p182
      $region22: #{tpu_custom_call.1} parent=5 // pred_check_branch
        %185 = sbr.rel (%p183) target = $region24
      $region23: #{tpu_custom_call.1} parent=5 // pred_region
        // Predicated region
        $region25: #{tpu_custom_call.1} parent=23 // pred_check
          %p186 = pneg %p41
        $region26: #{tpu_custom_call.1} parent=23 // pred_check_branch
          %188 = sbr.rel (%p186) target = $region28
        $region27: #{tpu_custom_call.1} parent=23 // pred_region
          %s189 = sand.u32 %s31, 1
          %s190 = scalar_lea.sflag [#allocation3], %s189
          %s191 = sand.u32 %s31, 1
          %s192 = smul.addr %s191, 128
          %s193 = scalar_lea.vmem [#allocation2], %s192
          %s194 = smul.u32 16, %s21
          %s196 = ssub.s32 2048, 2048
          %197 = vsyncadd %s190, %s196
          %s198 = smul.addr %s194, 128
          %s199 = scalar_lea.hbm %s0, %s198
          %s200 = sshll.u32 %s193, 4
          %s201 = int_to_ptr.vmem [resolvable:$true] %s200
          %206 = dma.hbm_to_vmem [thread:$0]  %s199, 2048, %s201, %s190, 128, 128, 8
        $region28: #{tpu_custom_call.1} parent=23 // pred_fallthru
          _
      $region24: #{tpu_custom_call.1} parent=5 // pred_fallthru
        _
      %p207 = scmp.le.s32.totalorder 1, %s21
      %p208 = scmp.lt.s32.totalorder %s21, 3
      %p209 = pnand %p207, %p208
      %p210 = pneg %p209
      // Predicated region
      $region29: #{tpu_custom_call.1} parent=5 // pred_check
        _
      $region30: #{tpu_custom_call.1} parent=5 // pred_check_branch
        %212 = sbr.rel (%p209) target = $region32
      $region31: #{tpu_custom_call.1} parent=5 // pred_region
        %s213 = ssub.s32 %s21, 1
        %s214 = sand.u32 %s34, 1
        %s215 = scalar_lea.sflag [#allocation3], %s214
        %s216 = sand.u32 %s34, 1
        %s217 = smul.addr %s216, 128
        %s218 = scalar_lea.vmem [#allocation2], %s217
        // Predicated region
        $region33: #{tpu_custom_call.1} parent=31 // pred_check
          %p219 = pneg %p47
        $region34: #{tpu_custom_call.1} parent=31 // pred_check_branch
          %221 = sbr.rel (%p219) target = $region36
        $region35: #{tpu_custom_call.1} parent=31 // pred_region
          %222 = dma.done %s215, 2048
        $region36: #{tpu_custom_call.1} parent=31 // pred_fallthru
          _
        // Predicated region
        $region37: #{tpu_custom_call.1} parent=31 // pred_check
          %p223 = pneg %p68
        $region38: #{tpu_custom_call.1} parent=31 // pred_check_branch
          %225 = sbr.rel (%p223) target = $region40
        $region39: #{tpu_custom_call.1} parent=31 // pred_region
          %226 = dma.done [#allocation6], 6144
        $region40: #{tpu_custom_call.1} parent=31 // pred_fallthru
          _
        // Predicated region
        $region41: #{tpu_custom_call.1} parent=31 // pred_check
          %p227 = pneg %p89
        $region42: #{tpu_custom_call.1} parent=31 // pred_check_branch
          %229 = sbr.rel (%p227) target = $region44
        $region43: #{tpu_custom_call.1} parent=31 // pred_region
          %230 = dma.done [#allocation6], 96
        $region44: #{tpu_custom_call.1} parent=31 // pred_fallthru
          _
        %s231 = sand.u32 %s34, 1
        %s232 = scalar_lea.sflag [#allocation3], %s231
        %s233 = sand.u32 %s34, 1
        %s234 = smul.addr %s233, 128
        %s235 = scalar_lea.vmem [#allocation2], %s234
        %p236 = pneg %p47
        %p237 = pneg %p44
        %p238 = pneg %p68
        %p239 = pneg %p65
        %p240 = pneg %p89
        %p241 = pneg %p86
        %p242 = pneg %p115
        %p243 = pneg %p112
        %s244 = sand.u32 %s102, 1
        %s245 = scalar_lea.sflag [#allocation4], %s244
        %s246 = sand.u32 %s102, 1
        %s247 = smul.addr %s246, 128
        %s248 = scalar_lea.vmem [#allocation8], %s247
        %p249 = pneg %p141
        %p250 = pneg %p138
        %s251 = sand.u32 %s128, 1
        %s252 = scalar_lea.sflag [#allocation10], %s251
        %s253 = sand.u32 %s128, 1
        %s254 = smul.addr %s253, 128
        %s255 = scalar_lea.vmem [#allocation9], %s254
        %s256 = smul.u32 16, %s26
        %s257 = smul.u32 16, %s26
        %s258 = smul.u32 16, %s26
        %v260 = vld [vmem:[%s218] sm:$0xff]
        %v261 = vld [vmem:[%s218 + $0x8] sm:$0xff]
        %v262 = vld [vmem:[%s218 + $0x10] sm:$0xff]
        %v263 = vld [vmem:[%s218 + $0x18] sm:$0xff]
        %v264 = vld [vmem:[%s218 + $0x20] sm:$0xff]
        %v265 = vld [vmem:[%s218 + $0x28] sm:$0xff]
        %v266 = vld [vmem:[%s218 + $0x30] sm:$0xff]
        %v267 = vld [vmem:[%s218 + $0x38] sm:$0xff]
        %v268 = vld [vmem:[%s218 + $0x40] sm:$0xff]
        %v269 = vld [vmem:[%s218 + $0x48] sm:$0xff]
        %v270 = vld [vmem:[%s218 + $0x50] sm:$0xff]
        %v271 = vld [vmem:[%s218 + $0x58] sm:$0xff]
        %v272 = vld [vmem:[%s218 + $0x60] sm:$0xff]
        %v273 = vld [vmem:[%s218 + $0x68] sm:$0xff]
        %v274 = vld [vmem:[%s218 + $0x70] sm:$0xff]
        %v275 = vld [vmem:[%s218 + $0x78] sm:$0xff]
        %v276 = vpack.c.bf16 %v261, %v260
        %v277 = vpack.c.bf16 %v263, %v262
        %v278 = vpack.c.bf16 %v265, %v264
        %v279 = vpack.c.bf16 %v267, %v266
        %v280 = vpack.c.bf16 %v269, %v268
        %v281 = vpack.c.bf16 %v271, %v270
        %v282 = vpack.c.bf16 %v273, %v272
        %v283 = vpack.c.bf16 %v275, %v274
        %v284 = vld [vmem:[#allocation5] sm:$0xf]
        %v285 = vld [vmem:[#allocation5 + $0x4] sm:$0xf]
        %v286 = vld [vmem:[#allocation5 + $0x8] sm:$0xf]
        %v287 = vld [vmem:[#allocation5 + $0xc] sm:$0xf]
        %v288 = vld [vmem:[#allocation5 + $0x10] sm:$0xf]
        %v289 = vld [vmem:[#allocation5 + $0x14] sm:$0xf]
        %v290 = vld [vmem:[#allocation5 + $0x18] sm:$0xf]
        %v291 = vld [vmem:[#allocation5 + $0x1c] sm:$0xf]
        %v292 = vld [vmem:[#allocation5 + $0x20] sm:$0xf]
        %v293 = vld [vmem:[#allocation5 + $0x24] sm:$0xf]
        %v294 = vld [vmem:[#allocation5 + $0x28] sm:$0xf]
        %v295 = vld [vmem:[#allocation5 + $0x2c] sm:$0xf]
        %v296 = vld [vmem:[#allocation5 + $0x30] sm:$0xf]
        %v297 = vld [vmem:[#allocation5 + $0x34] sm:$0xf]
        %v298 = vld [vmem:[#allocation5 + $0x38] sm:$0xf]
        %v299 = vld [vmem:[#allocation5 + $0x3c] sm:$0xf]
        %v300 = vld [vmem:[#allocation7] sm:$0x1]
        %v302 = vlaneseq
        %v303 = vshrl.u32 %v302, 7
        %v304 = vsub.s32 0, %v303
        %v305 = vrot.slane %v300, %v304
        %v323 = vunpack.c.l.b16 %v284
        %v324 = vunpack.c.l.b16 %v285
        %v325 = vunpack.c.l.b16 %v286
        %v326 = vunpack.c.l.b16 %v287
        %v327 = vunpack.c.l.b16 %v288
        %v328 = vunpack.c.l.b16 %v289
        %v329 = vunpack.c.l.b16 %v290
        %v330 = vunpack.c.l.b16 %v291
        %v331 = vunpack.c.l.b16 %v292
        %v332 = vunpack.c.l.b16 %v293
        %v333 = vunpack.c.l.b16 %v294
        %v334 = vunpack.c.l.b16 %v295
        %v335 = vunpack.c.l.b16 %v296
        %v336 = vunpack.c.l.b16 %v297
        %v337 = vunpack.c.l.b16 %v298
        %v338 = vunpack.c.l.b16 %v299
        %v339 = vpack.c.b16 %v324, %v323
        %v340 = vpack.c.b16 %v326, %v325
        %v341 = vpack.c.b16 %v328, %v327
        %v342 = vpack.c.b16 %v330, %v329
        %v343 = vpack.c.b16 %v332, %v331
        %v344 = vpack.c.b16 %v334, %v333
        %v345 = vpack.c.b16 %v336, %v335
        %v346 = vpack.c.b16 %v338, %v337
        %355 = vmatprep.subr.bf16.mxu0 0
        %356 = vmatpush1.bf16.msra.mxu0 %v346
        %357 = vmatprep.subr.bf16.mxu0 0
        %358 = vmatpush1.bf16.msra.mxu0 %v345
        %359 = vmatprep.subr.bf16.mxu0 0
        %360 = vmatpush1.bf16.msra.mxu0 %v344
        %361 = vmatprep.subr.bf16.mxu0 0
        %362 = vmatpush1.bf16.msra.mxu0 %v343
        %363 = vmatprep.subr.bf16.mxu0 0
        %364 = vmatpush1.bf16.msra.mxu0 %v342
        %365 = vmatprep.subr.bf16.mxu0 0
        %366 = vmatpush1.bf16.msra.mxu0 %v341
        %367 = vmatprep.subr.bf16.mxu0 0
        %368 = vmatpush1.bf16.msra.mxu0 %v340
        %369 = vmatprep.subr.bf16.mxu0 0
        %370 = vmatpush1.bf16.msra.mxu0 %v339
        %371 = vmatprep.subr.bf16.mxu0 0
        %372 = vmatpush2.bf16.msra.mxu0 0
        %373 = vmatprep.subr.bf16.mxu0 0
        %374 = vmatpush2.bf16.msra.mxu0 0
        %375 = vmatprep.subr.bf16.mxu0 0
        %376 = vmatpush2.bf16.msra.mxu0 0
        %377 = vmatprep.subr.bf16.mxu0 0
        %378 = vmatpush2.bf16.msra.mxu0 0
        %379 = vmatprep.subr.bf16.mxu0 0
        %380 = vmatpush2.bf16.msra.mxu0 0
        %381 = vmatprep.subr.bf16.mxu0 0
        %382 = vmatpush2.bf16.msra.mxu0 0
        %383 = vmatprep.subr.bf16.mxu0 0
        %384 = vmatpush2.bf16.msra.mxu0 0
        %385 = vmatprep.subr.bf16.mxu0 0
        %386 = vmatpush2.bf16.msra.mxu0 0
        %387 = vmatprep.mubr.bf16.mxu0 0
        %388 = vmatmul.mubr.bf16.gmra.mxu0 %v276
        %v389 = vpop.f32.mrf.mxu0
        %v390 = vadd.f32 %v305, %v389
        %v391 = vpop.f32.mrf.mxu0
        %v392 = vpop.f32.mrf.mxu0
        %v393 = vadd.f32 %v305, %v392
        %v394 = vpop.f32.mrf.mxu0
        %395 = vmatprep.mubr.bf16.mxu0 0
        %396 = vmatmul.mubr.bf16.gmra.mxu0 %v277
        %v397 = vpop.f32.mrf.mxu0
        %v398 = vadd.f32 %v305, %v397
        %v399 = vpop.f32.mrf.mxu0
        %v400 = vpop.f32.mrf.mxu0
        %v401 = vadd.f32 %v305, %v400
        %v402 = vpop.f32.mrf.mxu0
        %403 = vmatprep.mubr.bf16.mxu0 0
        %404 = vmatmul.mubr.bf16.gmra.mxu0 %v278
        %v405 = vpop.f32.mrf.mxu0
        %v406 = vadd.f32 %v305, %v405
        %v407 = vpop.f32.mrf.mxu0
        %v408 = vpop.f32.mrf.mxu0
        %v409 = vadd.f32 %v305, %v408
        %v410 = vpop.f32.mrf.mxu0
        %411 = vmatprep.mubr.bf16.mxu0 0
        %412 = vmatmul.mubr.bf16.gmra.mxu0 %v279
        %v413 = vpop.f32.mrf.mxu0
        %v414 = vadd.f32 %v305, %v413
        %v415 = vpop.f32.mrf.mxu0
        %v416 = vpop.f32.mrf.mxu0
        %v417 = vadd.f32 %v305, %v416
        %v418 = vpop.f32.mrf.mxu0
        %419 = vmatprep.mubr.bf16.mxu0 0
        %420 = vmatmul.mubr.bf16.gmra.mxu0 %v280
        %v421 = vpop.f32.mrf.mxu0
        %v422 = vadd.f32 %v305, %v421
        %v423 = vpop.f32.mrf.mxu0
        %v424 = vpop.f32.mrf.mxu0
        %v425 = vadd.f32 %v305, %v424
        %v426 = vpop.f32.mrf.mxu0
        %427 = vmatprep.mubr.bf16.mxu0 0
        %428 = vmatmul.mubr.bf16.gmra.mxu0 %v281
        %v429 = vpop.f32.mrf.mxu0
        %v430 = vadd.f32 %v305, %v429
        %v431 = vpop.f32.mrf.mxu0
        %v432 = vpop.f32.mrf.mxu0
        %v433 = vadd.f32 %v305, %v432
        %v434 = vpop.f32.mrf.mxu0
        %435 = vmatprep.mubr.bf16.mxu0 0
        %436 = vmatmul.mubr.bf16.gmra.mxu0 %v282
        %v437 = vpop.f32.mrf.mxu0
        %v438 = vadd.f32 %v305, %v437
        %v439 = vpop.f32.mrf.mxu0
        %v440 = vpop.f32.mrf.mxu0
        %v441 = vadd.f32 %v305, %v440
        %v442 = vpop.f32.mrf.mxu0
        %443 = vmatprep.mubr.bf16.mxu0 0
        %444 = vmatmul.mubr.bf16.gmra.mxu0 %v283
        %v445 = vpop.f32.mrf.mxu0
        %v446 = vadd.f32 %v305, %v445
        %v447 = vpop.f32.mrf.mxu0
        %v448 = vpop.f32.mrf.mxu0
        %v449 = vadd.f32 %v305, %v448
        %v450 = vpop.f32.mrf.mxu0
        %451 = vdwg.mxu0
        %v452 = vmax.f32 %v390, 0.0
        %v453 = vmax.f32 %v393, 0.0
        %v454 = vmax.f32 %v398, 0.0
        %v455 = vmax.f32 %v401, 0.0
        %v456 = vmax.f32 %v406, 0.0
        %v457 = vmax.f32 %v409, 0.0
        %v458 = vmax.f32 %v414, 0.0
        %v459 = vmax.f32 %v417, 0.0
        %v460 = vmax.f32 %v422, 0.0
        %v461 = vmax.f32 %v425, 0.0
        %v462 = vmax.f32 %v430, 0.0
        %v463 = vmax.f32 %v433, 0.0
        %v464 = vmax.f32 %v438, 0.0
        %v465 = vmax.f32 %v441, 0.0
        %v466 = vmax.f32 %v446, 0.0
        %v467 = vmax.f32 %v449, 0.0
        %v468 = vpack.c.bf16 %v453, %v452
        %v469 = vpack.c.bf16 %v455, %v454
        %v470 = vpack.c.bf16 %v457, %v456
        %v471 = vpack.c.bf16 %v459, %v458
        %v472 = vpack.c.bf16 %v461, %v460
        %v473 = vpack.c.bf16 %v463, %v462
        %v474 = vpack.c.bf16 %v465, %v464
        %v475 = vpack.c.bf16 %v467, %v466
        %s476 = scalar_lea.vmem [#allocation5], 64
        %v477 = vld [vmem:[%s476] sm:$0xf]
        %v478 = vld [vmem:[%s476 + $0x4] sm:$0xf]
        %v479 = vld [vmem:[%s476 + $0x8] sm:$0xf]
        %v480 = vld [vmem:[%s476 + $0xc] sm:$0xf]
        %v481 = vld [vmem:[%s476 + $0x10] sm:$0xf]
        %v482 = vld [vmem:[%s476 + $0x14] sm:$0xf]
        %v483 = vld [vmem:[%s476 + $0x18] sm:$0xf]
        %v484 = vld [vmem:[%s476 + $0x1c] sm:$0xf]
        %v485 = vld [vmem:[%s476 + $0x20] sm:$0xf]
        %v486 = vld [vmem:[%s476 + $0x24] sm:$0xf]
        %v487 = vld [vmem:[%s476 + $0x28] sm:$0xf]
        %v488 = vld [vmem:[%s476 + $0x2c] sm:$0xf]
        %v489 = vld [vmem:[%s476 + $0x30] sm:$0xf]
        %v490 = vld [vmem:[%s476 + $0x34] sm:$0xf]
        %v491 = vld [vmem:[%s476 + $0x38] sm:$0xf]
        %v492 = vld [vmem:[%s476 + $0x3c] sm:$0xf]
        %s493 = scalar_lea.vmem [#allocation7], 1
        %v494 = vld [vmem:[%s493] sm:$0x1]
        %v496 = vlaneseq
        %v497 = vshrl.u32 %v496, 7
        %v498 = vsub.s32 0, %v497
        %v499 = vrot.slane %v494, %v498
        %v517 = vunpack.c.l.b16 %v477
        %v518 = vunpack.c.l.b16 %v478
        %v519 = vunpack.c.l.b16 %v479
        %v520 = vunpack.c.l.b16 %v480
        %v521 = vunpack.c.l.b16 %v481
        %v522 = vunpack.c.l.b16 %v482
        %v523 = vunpack.c.l.b16 %v483
        %v524 = vunpack.c.l.b16 %v484
        %v525 = vunpack.c.l.b16 %v485
        %v526 = vunpack.c.l.b16 %v486
        %v527 = vunpack.c.l.b16 %v487
        %v528 = vunpack.c.l.b16 %v488
        %v529 = vunpack.c.l.b16 %v489
        %v530 = vunpack.c.l.b16 %v490
        %v531 = vunpack.c.l.b16 %v491
        %v532 = vunpack.c.l.b16 %v492
        %v533 = vpack.c.b16 %v518, %v517
        %v534 = vpack.c.b16 %v520, %v519
        %v535 = vpack.c.b16 %v522, %v521
        %v536 = vpack.c.b16 %v524, %v523
        %v537 = vpack.c.b16 %v526, %v525
        %v538 = vpack.c.b16 %v528, %v527
        %v539 = vpack.c.b16 %v530, %v529
        %v540 = vpack.c.b16 %v532, %v531
        %549 = vmatprep.subr.bf16.mxu0 0
        %550 = vmatpush1.bf16.msra.mxu0 %v540
        %551 = vmatprep.subr.bf16.mxu0 0
        %552 = vmatpush1.bf16.msra.mxu0 %v539
        %553 = vmatprep.subr.bf16.mxu0 0
        %554 = vmatpush1.bf16.msra.mxu0 %v538
        %555 = vmatprep.subr.bf16.mxu0 0
        %556 = vmatpush1.bf16.msra.mxu0 %v537
        %557 = vmatprep.subr.bf16.mxu0 0
        %558 = vmatpush1.bf16.msra.mxu0 %v536
        %559 = vmatprep.subr.bf16.mxu0 0
        %560 = vmatpush1.bf16.msra.mxu0 %v535
        %561 = vmatprep.subr.bf16.mxu0 0
        %562 = vmatpush1.bf16.msra.mxu0 %v534
        %563 = vmatprep.subr.bf16.mxu0 0
        %564 = vmatpush1.bf16.msra.mxu0 %v533
        %565 = vmatprep.subr.bf16.mxu0 0
        %566 = vmatpush2.bf16.msra.mxu0 0
        %567 = vmatprep.subr.bf16.mxu0 0
        %568 = vmatpush2.bf16.msra.mxu0 0
        %569 = vmatprep.subr.bf16.mxu0 0
        %570 = vmatpush2.bf16.msra.mxu0 0
        %571 = vmatprep.subr.bf16.mxu0 0
        %572 = vmatpush2.bf16.msra.mxu0 0
        %573 = vmatprep.subr.bf16.mxu0 0
        %574 = vmatpush2.bf16.msra.mxu0 0
        %575 = vmatprep.subr.bf16.mxu0 0
        %576 = vmatpush2.bf16.msra.mxu0 0
        %577 = vmatprep.subr.bf16.mxu0 0
        %578 = vmatpush2.bf16.msra.mxu0 0
        %579 = vmatprep.subr.bf16.mxu0 0
        %580 = vmatpush2.bf16.msra.mxu0 0
        %581 = vmatprep.mubr.bf16.mxu0 0
        %582 = vmatmul.mubr.bf16.gmra.mxu0 %v468
        %v583 = vpop.f32.mrf.mxu0
        %v584 = vadd.f32 %v499, %v583
        %v585 = vpop.f32.mrf.mxu0
        %v586 = vpop.f32.mrf.mxu0
        %v587 = vadd.f32 %v499, %v586
        %v588 = vpop.f32.mrf.mxu0
        %589 = vmatprep.mubr.bf16.mxu0 0
        %590 = vmatmul.mubr.bf16.gmra.mxu0 %v469
        %v591 = vpop.f32.mrf.mxu0
        %v592 = vadd.f32 %v499, %v591
        %v593 = vpop.f32.mrf.mxu0
        %v594 = vpop.f32.mrf.mxu0
        %v595 = vadd.f32 %v499, %v594
        %v596 = vpop.f32.mrf.mxu0
        %597 = vmatprep.mubr.bf16.mxu0 0
        %598 = vmatmul.mubr.bf16.gmra.mxu0 %v470
        %v599 = vpop.f32.mrf.mxu0
        %v600 = vadd.f32 %v499, %v599
        %v601 = vpop.f32.mrf.mxu0
        %v602 = vpop.f32.mrf.mxu0
        %v603 = vadd.f32 %v499, %v602
        %v604 = vpop.f32.mrf.mxu0
        %605 = vmatprep.mubr.bf16.mxu0 0
        %606 = vmatmul.mubr.bf16.gmra.mxu0 %v471
        %v607 = vpop.f32.mrf.mxu0
        %v608 = vadd.f32 %v499, %v607
        %v609 = vpop.f32.mrf.mxu0
        %v610 = vpop.f32.mrf.mxu0
        %v611 = vadd.f32 %v499, %v610
        %v612 = vpop.f32.mrf.mxu0
        %613 = vmatprep.mubr.bf16.mxu0 0
        %614 = vmatmul.mubr.bf16.gmra.mxu0 %v472
        %v615 = vpop.f32.mrf.mxu0
        %v616 = vadd.f32 %v499, %v615
        %v617 = vpop.f32.mrf.mxu0
        %v618 = vpop.f32.mrf.mxu0
        %v619 = vadd.f32 %v499, %v618
        %v620 = vpop.f32.mrf.mxu0
        %621 = vmatprep.mubr.bf16.mxu0 0
        %622 = vmatmul.mubr.bf16.gmra.mxu0 %v473
        %v623 = vpop.f32.mrf.mxu0
        %v624 = vadd.f32 %v499, %v623
        %v625 = vpop.f32.mrf.mxu0
        %v626 = vpop.f32.mrf.mxu0
        %v627 = vadd.f32 %v499, %v626
        %v628 = vpop.f32.mrf.mxu0
        %629 = vmatprep.mubr.bf16.mxu0 0
        %630 = vmatmul.mubr.bf16.gmra.mxu0 %v474
        %v631 = vpop.f32.mrf.mxu0
        %v632 = vadd.f32 %v499, %v631
        %v633 = vpop.f32.mrf.mxu0
        %v634 = vpop.f32.mrf.mxu0
        %v635 = vadd.f32 %v499, %v634
        %v636 = vpop.f32.mrf.mxu0
        %637 = vmatprep.mubr.bf16.mxu0 0
        %638 = vmatmul.mubr.bf16.gmra.mxu0 %v475
        %v639 = vpop.f32.mrf.mxu0
        %v640 = vadd.f32 %v499, %v639
        %v641 = vpop.f32.mrf.mxu0
        %v642 = vpop.f32.mrf.mxu0
        %v643 = vadd.f32 %v499, %v642
        %v644 = vpop.f32.mrf.mxu0
        %645 = vdwg.mxu0
        %v646 = vmax.f32 %v584, 0.0
        %v647 = vmax.f32 %v587, 0.0
        %v648 = vmax.f32 %v592, 0.0
        %v649 = vmax.f32 %v595, 0.0
        %v650 = vmax.f32 %v600, 0.0
        %v651 = vmax.f32 %v603, 0.0
        %v652 = vmax.f32 %v608, 0.0
        %v653 = vmax.f32 %v611, 0.0
        %v654 = vmax.f32 %v616, 0.0
        %v655 = vmax.f32 %v619, 0.0
        %v656 = vmax.f32 %v624, 0.0
        %v657 = vmax.f32 %v627, 0.0
        %v658 = vmax.f32 %v632, 0.0
        %v659 = vmax.f32 %v635, 0.0
        %v660 = vmax.f32 %v640, 0.0
        %v661 = vmax.f32 %v643, 0.0
        %v662 = vpack.c.bf16 %v647, %v646
        %v663 = vpack.c.bf16 %v649, %v648
        %v664 = vpack.c.bf16 %v651, %v650
        %v665 = vpack.c.bf16 %v653, %v652
        %v666 = vpack.c.bf16 %v655, %v654
        %v667 = vpack.c.bf16 %v657, %v656
        %v668 = vpack.c.bf16 %v659, %v658
        %v669 = vpack.c.bf16 %v661, %v660
        %s670 = scalar_lea.vmem [#allocation5], 128
        %v671 = vld [vmem:[%s670] sm:$0xf]
        %v672 = vld [vmem:[%s670 + $0x4] sm:$0xf]
        %v673 = vld [vmem:[%s670 + $0x8] sm:$0xf]
        %v674 = vld [vmem:[%s670 + $0xc] sm:$0xf]
        %v675 = vld [vmem:[%s670 + $0x10] sm:$0xf]
        %v676 = vld [vmem:[%s670 + $0x14] sm:$0xf]
        %v677 = vld [vmem:[%s670 + $0x18] sm:$0xf]
        %v678 = vld [vmem:[%s670 + $0x1c] sm:$0xf]
        %v679 = vld [vmem:[%s670 + $0x20] sm:$0xf]
        %v680 = vld [vmem:[%s670 + $0x24] sm:$0xf]
        %v681 = vld [vmem:[%s670 + $0x28] sm:$0xf]
        %v682 = vld [vmem:[%s670 + $0x2c] sm:$0xf]
        %v683 = vld [vmem:[%s670 + $0x30] sm:$0xf]
        %v684 = vld [vmem:[%s670 + $0x34] sm:$0xf]
        %v685 = vld [vmem:[%s670 + $0x38] sm:$0xf]
        %v686 = vld [vmem:[%s670 + $0x3c] sm:$0xf]
        %s687 = scalar_lea.vmem [#allocation7], 2
        %v688 = vld [vmem:[%s687] sm:$0x1]
        %v690 = vlaneseq
        %v691 = vshrl.u32 %v690, 7
        %v692 = vsub.s32 0, %v691
        %v693 = vrot.slane %v688, %v692
        %v711 = vunpack.c.l.b16 %v671
        %v712 = vunpack.c.l.b16 %v672
        %v713 = vunpack.c.l.b16 %v673
        %v714 = vunpack.c.l.b16 %v674
        %v715 = vunpack.c.l.b16 %v675
        %v716 = vunpack.c.l.b16 %v676
        %v717 = vunpack.c.l.b16 %v677
        %v718 = vunpack.c.l.b16 %v678
        %v719 = vunpack.c.l.b16 %v679
        %v720 = vunpack.c.l.b16 %v680
        %v721 = vunpack.c.l.b16 %v681
        %v722 = vunpack.c.l.b16 %v682
        %v723 = vunpack.c.l.b16 %v683
        %v724 = vunpack.c.l.b16 %v684
        %v725 = vunpack.c.l.b16 %v685
        %v726 = vunpack.c.l.b16 %v686
        %v727 = vpack.c.b16 %v712, %v711
        %v728 = vpack.c.b16 %v714, %v713
        %v729 = vpack.c.b16 %v716, %v715
        %v730 = vpack.c.b16 %v718, %v717
        %v731 = vpack.c.b16 %v720, %v719
        %v732 = vpack.c.b16 %v722, %v721
        %v733 = vpack.c.b16 %v724, %v723
        %v734 = vpack.c.b16 %v726, %v725
        %743 = vmatprep.subr.bf16.mxu0 0
        %744 = vmatpush1.bf16.msra.mxu0 %v734
        %745 = vmatprep.subr.bf16.mxu0 0
        %746 = vmatpush1.bf16.msra.mxu0 %v733
        %747 = vmatprep.subr.bf16.mxu0 0
        %748 = vmatpush1.bf16.msra.mxu0 %v732
        %749 = vmatprep.subr.bf16.mxu0 0
        %750 = vmatpush1.bf16.msra.mxu0 %v731
        %751 = vmatprep.subr.bf16.mxu0 0
        %752 = vmatpush1.bf16.msra.mxu0 %v730
        %753 = vmatprep.subr.bf16.mxu0 0
        %754 = vmatpush1.bf16.msra.mxu0 %v729
        %755 = vmatprep.subr.bf16.mxu0 0
        %756 = vmatpush1.bf16.msra.mxu0 %v728
        %757 = vmatprep.subr.bf16.mxu0 0
        %758 = vmatpush1.bf16.msra.mxu0 %v727
        %759 = vmatprep.subr.bf16.mxu0 0
        %760 = vmatpush2.bf16.msra.mxu0 0
        %761 = vmatprep.subr.bf16.mxu0 0
        %762 = vmatpush2.bf16.msra.mxu0 0
        %763 = vmatprep.subr.bf16.mxu0 0
        %764 = vmatpush2.bf16.msra.mxu0 0
        %765 = vmatprep.subr.bf16.mxu0 0
        %766 = vmatpush2.bf16.msra.mxu0 0
        %767 = vmatprep.subr.bf16.mxu0 0
        %768 = vmatpush2.bf16.msra.mxu0 0
        %769 = vmatprep.subr.bf16.mxu0 0
        %770 = vmatpush2.bf16.msra.mxu0 0
        %771 = vmatprep.subr.bf16.mxu0 0
        %772 = vmatpush2.bf16.msra.mxu0 0
        %773 = vmatprep.subr.bf16.mxu0 0
        %774 = vmatpush2.bf16.msra.mxu0 0
        %775 = vmatprep.mubr.bf16.mxu0 0
        %776 = vmatmul.mubr.bf16.gmra.mxu0 %v662
        %v777 = vpop.f32.mrf.mxu0
        %v778 = vadd.f32 %v693, %v777
        %v779 = vpop.f32.mrf.mxu0
        %v780 = vpop.f32.mrf.mxu0
        %v781 = vadd.f32 %v693, %v780
        %v782 = vpop.f32.mrf.mxu0
        %783 = vmatprep.mubr.bf16.mxu0 0
        %784 = vmatmul.mubr.bf16.gmra.mxu0 %v663
        %v785 = vpop.f32.mrf.mxu0
        %v786 = vadd.f32 %v693, %v785
        %v787 = vpop.f32.mrf.mxu0
        %v788 = vpop.f32.mrf.mxu0
        %v789 = vadd.f32 %v693, %v788
        %v790 = vpop.f32.mrf.mxu0
        %791 = vmatprep.mubr.bf16.mxu0 0
        %792 = vmatmul.mubr.bf16.gmra.mxu0 %v664
        %v793 = vpop.f32.mrf.mxu0
        %v794 = vadd.f32 %v693, %v793
        %v795 = vpop.f32.mrf.mxu0
        %v796 = vpop.f32.mrf.mxu0
        %v797 = vadd.f32 %v693, %v796
        %v798 = vpop.f32.mrf.mxu0
        %799 = vmatprep.mubr.bf16.mxu0 0
        %800 = vmatmul.mubr.bf16.gmra.mxu0 %v665
        %v801 = vpop.f32.mrf.mxu0
        %v802 = vadd.f32 %v693, %v801
        %v803 = vpop.f32.mrf.mxu0
        %v804 = vpop.f32.mrf.mxu0
        %v805 = vadd.f32 %v693, %v804
        %v806 = vpop.f32.mrf.mxu0
        %807 = vmatprep.mubr.bf16.mxu0 0
        %808 = vmatmul.mubr.bf16.gmra.mxu0 %v666
        %v809 = vpop.f32.mrf.mxu0
        %v810 = vadd.f32 %v693, %v809
        %v811 = vpop.f32.mrf.mxu0
        %v812 = vpop.f32.mrf.mxu0
        %v813 = vadd.f32 %v693, %v812
        %v814 = vpop.f32.mrf.mxu0
        %815 = vmatprep.mubr.bf16.mxu0 0
        %816 = vmatmul.mubr.bf16.gmra.mxu0 %v667
        %v817 = vpop.f32.mrf.mxu0
        %v818 = vadd.f32 %v693, %v817
        %v819 = vpop.f32.mrf.mxu0
        %v820 = vpop.f32.mrf.mxu0
        %v821 = vadd.f32 %v693, %v820
        %v822 = vpop.f32.mrf.mxu0
        %823 = vmatprep.mubr.bf16.mxu0 0
        %824 = vmatmul.mubr.bf16.gmra.mxu0 %v668
        %v825 = vpop.f32.mrf.mxu0
        %v826 = vadd.f32 %v693, %v825
        %v827 = vpop.f32.mrf.mxu0
        %v828 = vpop.f32.mrf.mxu0
        %v829 = vadd.f32 %v693, %v828
        %v830 = vpop.f32.mrf.mxu0
        %831 = vmatprep.mubr.bf16.mxu0 0
        %832 = vmatmul.mubr.bf16.gmra.mxu0 %v669
        %v833 = vpop.f32.mrf.mxu0
        %v834 = vadd.f32 %v693, %v833
        %v835 = vpop.f32.mrf.mxu0
        %v836 = vpop.f32.mrf.mxu0
        %v837 = vadd.f32 %v693, %v836
        %v838 = vpop.f32.mrf.mxu0
        %839 = vdwg.mxu0
        %840 = vst [vmem:[%s255] sm:$0xff] %v778
        %841 = vst [vmem:[%s255 + $0x8] sm:$0xff] %v781
        %842 = vst [vmem:[%s255 + $0x10] sm:$0xff] %v786
        %843 = vst [vmem:[%s255 + $0x18] sm:$0xff] %v789
        %844 = vst [vmem:[%s255 + $0x20] sm:$0xff] %v794
        %845 = vst [vmem:[%s255 + $0x28] sm:$0xff] %v797
        %846 = vst [vmem:[%s255 + $0x30] sm:$0xff] %v802
        %847 = vst [vmem:[%s255 + $0x38] sm:$0xff] %v805
        %848 = vst [vmem:[%s255 + $0x40] sm:$0xff] %v810
        %849 = vst [vmem:[%s255 + $0x48] sm:$0xff] %v813
        %850 = vst [vmem:[%s255 + $0x50] sm:$0xff] %v818
        %851 = vst [vmem:[%s255 + $0x58] sm:$0xff] %v821
        %852 = vst [vmem:[%s255 + $0x60] sm:$0xff] %v826
        %853 = vst [vmem:[%s255 + $0x68] sm:$0xff] %v829
        %854 = vst [vmem:[%s255 + $0x70] sm:$0xff] %v834
        %855 = vst [vmem:[%s255 + $0x78] sm:$0xff] %v837
        %v856 = vpack.c.bf16 %v781, %v778
        %v857 = vpack.c.bf16 %v789, %v786
        %v858 = vpack.c.bf16 %v797, %v794
        %v859 = vpack.c.bf16 %v805, %v802
        %v860 = vpack.c.bf16 %v813, %v810
        %v861 = vpack.c.bf16 %v821, %v818
        %v862 = vpack.c.bf16 %v829, %v826
        %v863 = vpack.c.bf16 %v837, %v834
        %s864 = scalar_lea.vmem [#allocation5], 192
        %v865 = vld [vmem:[%s864] sm:$0xf]
        %v866 = vld [vmem:[%s864 + $0x4] sm:$0xf]
        %v867 = vld [vmem:[%s864 + $0x8] sm:$0xf]
        %v868 = vld [vmem:[%s864 + $0xc] sm:$0xf]
        %v869 = vld [vmem:[%s864 + $0x10] sm:$0xf]
        %v870 = vld [vmem:[%s864 + $0x14] sm:$0xf]
        %v871 = vld [vmem:[%s864 + $0x18] sm:$0xf]
        %v872 = vld [vmem:[%s864 + $0x1c] sm:$0xf]
        %v873 = vld [vmem:[%s864 + $0x20] sm:$0xf]
        %v874 = vld [vmem:[%s864 + $0x24] sm:$0xf]
        %v875 = vld [vmem:[%s864 + $0x28] sm:$0xf]
        %v876 = vld [vmem:[%s864 + $0x2c] sm:$0xf]
        %v877 = vld [vmem:[%s864 + $0x30] sm:$0xf]
        %v878 = vld [vmem:[%s864 + $0x34] sm:$0xf]
        %v879 = vld [vmem:[%s864 + $0x38] sm:$0xf]
        %v880 = vld [vmem:[%s864 + $0x3c] sm:$0xf]
        %s881 = scalar_lea.vmem [#allocation7], 3
        %v882 = vld [vmem:[%s881] sm:$0x1]
        %v884 = vlaneseq
        %v885 = vshrl.u32 %v884, 7
        %v886 = vsub.s32 0, %v885
        %v887 = vrot.slane %v882, %v886
        %v905 = vunpack.c.l.b16 %v865
        %v906 = vunpack.c.l.b16 %v866
        %v907 = vunpack.c.l.b16 %v867
        %v908 = vunpack.c.l.b16 %v868
        %v909 = vunpack.c.l.b16 %v869
        %v910 = vunpack.c.l.b16 %v870
        %v911 = vunpack.c.l.b16 %v871
        %v912 = vunpack.c.l.b16 %v872
        %v913 = vunpack.c.l.b16 %v873
        %v914 = vunpack.c.l.b16 %v874
        %v915 = vunpack.c.l.b16 %v875
        %v916 = vunpack.c.l.b16 %v876
        %v917 = vunpack.c.l.b16 %v877
        %v918 = vunpack.c.l.b16 %v878
        %v919 = vunpack.c.l.b16 %v879
        %v920 = vunpack.c.l.b16 %v880
        %v921 = vpack.c.b16 %v906, %v905
        %v922 = vpack.c.b16 %v908, %v907
        %v923 = vpack.c.b16 %v910, %v909
        %v924 = vpack.c.b16 %v912, %v911
        %v925 = vpack.c.b16 %v914, %v913
        %v926 = vpack.c.b16 %v916, %v915
        %v927 = vpack.c.b16 %v918, %v917
        %v928 = vpack.c.b16 %v920, %v919
        %937 = vmatprep.subr.bf16.mxu0 0
        %938 = vmatpush1.bf16.msra.mxu0 %v928
        %939 = vmatprep.subr.bf16.mxu0 0
        %940 = vmatpush1.bf16.msra.mxu0 %v927
        %941 = vmatprep.subr.bf16.mxu0 0
        %942 = vmatpush1.bf16.msra.mxu0 %v926
        %943 = vmatprep.subr.bf16.mxu0 0
        %944 = vmatpush1.bf16.msra.mxu0 %v925
        %945 = vmatprep.subr.bf16.mxu0 0
        %946 = vmatpush1.bf16.msra.mxu0 %v924
        %947 = vmatprep.subr.bf16.mxu0 0
        %948 = vmatpush1.bf16.msra.mxu0 %v923
        %949 = vmatprep.subr.bf16.mxu0 0
        %950 = vmatpush1.bf16.msra.mxu0 %v922
        %951 = vmatprep.subr.bf16.mxu0 0
        %952 = vmatpush1.bf16.msra.mxu0 %v921
        %953 = vmatprep.subr.bf16.mxu0 0
        %954 = vmatpush2.bf16.msra.mxu0 0
        %955 = vmatprep.subr.bf16.mxu0 0
        %956 = vmatpush2.bf16.msra.mxu0 0
        %957 = vmatprep.subr.bf16.mxu0 0
        %958 = vmatpush2.bf16.msra.mxu0 0
        %959 = vmatprep.subr.bf16.mxu0 0
        %960 = vmatpush2.bf16.msra.mxu0 0
        %961 = vmatprep.subr.bf16.mxu0 0
        %962 = vmatpush2.bf16.msra.mxu0 0
        %963 = vmatprep.subr.bf16.mxu0 0
        %964 = vmatpush2.bf16.msra.mxu0 0
        %965 = vmatprep.subr.bf16.mxu0 0
        %966 = vmatpush2.bf16.msra.mxu0 0
        %967 = vmatprep.subr.bf16.mxu0 0
        %968 = vmatpush2.bf16.msra.mxu0 0
        %969 = vmatprep.mubr.bf16.mxu0 0
        %970 = vmatmul.mubr.bf16.gmra.mxu0 %v856
        %v971 = vpop.f32.mrf.mxu0
        %v972 = vadd.f32 %v887, %v971
        %v973 = vpop.f32.mrf.mxu0
        %v974 = vpop.f32.mrf.mxu0
        %v975 = vadd.f32 %v887, %v974
        %v976 = vpop.f32.mrf.mxu0
        %977 = vmatprep.mubr.bf16.mxu0 0
        %978 = vmatmul.mubr.bf16.gmra.mxu0 %v857
        %v979 = vpop.f32.mrf.mxu0
        %v980 = vadd.f32 %v887, %v979
        %v981 = vpop.f32.mrf.mxu0
        %v982 = vpop.f32.mrf.mxu0
        %v983 = vadd.f32 %v887, %v982
        %v984 = vpop.f32.mrf.mxu0
        %985 = vmatprep.mubr.bf16.mxu0 0
        %986 = vmatmul.mubr.bf16.gmra.mxu0 %v858
        %v987 = vpop.f32.mrf.mxu0
        %v988 = vadd.f32 %v887, %v987
        %v989 = vpop.f32.mrf.mxu0
        %v990 = vpop.f32.mrf.mxu0
        %v991 = vadd.f32 %v887, %v990
        %v992 = vpop.f32.mrf.mxu0
        %993 = vmatprep.mubr.bf16.mxu0 0
        %994 = vmatmul.mubr.bf16.gmra.mxu0 %v859
        %v995 = vpop.f32.mrf.mxu0
        %v996 = vadd.f32 %v887, %v995
        %v997 = vpop.f32.mrf.mxu0
        %v998 = vpop.f32.mrf.mxu0
        %v999 = vadd.f32 %v887, %v998
        %v1000 = vpop.f32.mrf.mxu0
        %1001 = vmatprep.mubr.bf16.mxu0 0
        %1002 = vmatmul.mubr.bf16.gmra.mxu0 %v860
        %v1003 = vpop.f32.mrf.mxu0
        %v1004 = vadd.f32 %v887, %v1003
        %v1005 = vpop.f32.mrf.mxu0
        %v1006 = vpop.f32.mrf.mxu0
        %v1007 = vadd.f32 %v887, %v1006
        %v1008 = vpop.f32.mrf.mxu0
        %1009 = vmatprep.mubr.bf16.mxu0 0
        %1010 = vmatmul.mubr.bf16.gmra.mxu0 %v861
        %v1011 = vpop.f32.mrf.mxu0
        %v1012 = vadd.f32 %v887, %v1011
        %v1013 = vpop.f32.mrf.mxu0
        %v1014 = vpop.f32.mrf.mxu0
        %v1015 = vadd.f32 %v887, %v1014
        %v1016 = vpop.f32.mrf.mxu0
        %1017 = vmatprep.mubr.bf16.mxu0 0
        %1018 = vmatmul.mubr.bf16.gmra.mxu0 %v862
        %v1019 = vpop.f32.mrf.mxu0
        %v1020 = vadd.f32 %v887, %v1019
        %v1021 = vpop.f32.mrf.mxu0
        %v1022 = vpop.f32.mrf.mxu0
        %v1023 = vadd.f32 %v887, %v1022
        %v1024 = vpop.f32.mrf.mxu0
        %1025 = vmatprep.mubr.bf16.mxu0 0
        %1026 = vmatmul.mubr.bf16.gmra.mxu0 %v863
        %v1027 = vpop.f32.mrf.mxu0
        %v1028 = vadd.f32 %v887, %v1027
        %v1029 = vpop.f32.mrf.mxu0
        %v1030 = vpop.f32.mrf.mxu0
        %v1031 = vadd.f32 %v887, %v1030
        %v1032 = vpop.f32.mrf.mxu0
        %1033 = vdwg.mxu0
        %v1034 = vmax.f32 %v972, 0.0
        %v1035 = vmax.f32 %v975, 0.0
        %v1036 = vmax.f32 %v980, 0.0
        %v1037 = vmax.f32 %v983, 0.0
        %v1038 = vmax.f32 %v988, 0.0
        %v1039 = vmax.f32 %v991, 0.0
        %v1040 = vmax.f32 %v996, 0.0
        %v1041 = vmax.f32 %v999, 0.0
        %v1042 = vmax.f32 %v1004, 0.0
        %v1043 = vmax.f32 %v1007, 0.0
        %v1044 = vmax.f32 %v1012, 0.0
        %v1045 = vmax.f32 %v1015, 0.0
        %v1046 = vmax.f32 %v1020, 0.0
        %v1047 = vmax.f32 %v1023, 0.0
        %v1048 = vmax.f32 %v1028, 0.0
        %v1049 = vmax.f32 %v1031, 0.0
        %v1050 = vpack.c.bf16 %v1035, %v1034
        %v1051 = vpack.c.bf16 %v1037, %v1036
        %v1052 = vpack.c.bf16 %v1039, %v1038
        %v1053 = vpack.c.bf16 %v1041, %v1040
        %v1054 = vpack.c.bf16 %v1043, %v1042
        %v1055 = vpack.c.bf16 %v1045, %v1044
        %v1056 = vpack.c.bf16 %v1047, %v1046
        %v1057 = vpack.c.bf16 %v1049, %v1048
        %s1058 = scalar_lea.vmem [#allocation5], 256
        %v1059 = vld [vmem:[%s1058] sm:$0xf]
        %v1060 = vld [vmem:[%s1058 + $0x4] sm:$0xf]
        %v1061 = vld [vmem:[%s1058 + $0x8] sm:$0xf]
        %v1062 = vld [vmem:[%s1058 + $0xc] sm:$0xf]
        %v1063 = vld [vmem:[%s1058 + $0x10] sm:$0xf]
        %v1064 = vld [vmem:[%s1058 + $0x14] sm:$0xf]
        %v1065 = vld [vmem:[%s1058 + $0x18] sm:$0xf]
        %v1066 = vld [vmem:[%s1058 + $0x1c] sm:$0xf]
        %v1067 = vld [vmem:[%s1058 + $0x20] sm:$0xf]
        %v1068 = vld [vmem:[%s1058 + $0x24] sm:$0xf]
        %v1069 = vld [vmem:[%s1058 + $0x28] sm:$0xf]
        %v1070 = vld [vmem:[%s1058 + $0x2c] sm:$0xf]
        %v1071 = vld [vmem:[%s1058 + $0x30] sm:$0xf]
        %v1072 = vld [vmem:[%s1058 + $0x34] sm:$0xf]
        %v1073 = vld [vmem:[%s1058 + $0x38] sm:$0xf]
        %v1074 = vld [vmem:[%s1058 + $0x3c] sm:$0xf]
        %s1075 = scalar_lea.vmem [#allocation7], 4
        %v1076 = vld [vmem:[%s1075] sm:$0x1]
        %v1078 = vlaneseq
        %v1079 = vshrl.u32 %v1078, 7
        %v1080 = vsub.s32 0, %v1079
        %v1081 = vrot.slane %v1076, %v1080
        %v1099 = vunpack.c.l.b16 %v1059
        %v1100 = vunpack.c.l.b16 %v1060
        %v1101 = vunpack.c.l.b16 %v1061
        %v1102 = vunpack.c.l.b16 %v1062
        %v1103 = vunpack.c.l.b16 %v1063
        %v1104 = vunpack.c.l.b16 %v1064
        %v1105 = vunpack.c.l.b16 %v1065
        %v1106 = vunpack.c.l.b16 %v1066
        %v1107 = vunpack.c.l.b16 %v1067
        %v1108 = vunpack.c.l.b16 %v1068
        %v1109 = vunpack.c.l.b16 %v1069
        %v1110 = vunpack.c.l.b16 %v1070
        %v1111 = vunpack.c.l.b16 %v1071
        %v1112 = vunpack.c.l.b16 %v1072
        %v1113 = vunpack.c.l.b16 %v1073
        %v1114 = vunpack.c.l.b16 %v1074
        %v1115 = vpack.c.b16 %v1100, %v1099
        %v1116 = vpack.c.b16 %v1102, %v1101
        %v1117 = vpack.c.b16 %v1104, %v1103
        %v1118 = vpack.c.b16 %v1106, %v1105
        %v1119 = vpack.c.b16 %v1108, %v1107
        %v1120 = vpack.c.b16 %v1110, %v1109
        %v1121 = vpack.c.b16 %v1112, %v1111
        %v1122 = vpack.c.b16 %v1114, %v1113
        %1131 = vmatprep.subr.bf16.mxu0 0
        %1132 = vmatpush1.bf16.msra.mxu0 %v1122
        %1133 = vmatprep.subr.bf16.mxu0 0
        %1134 = vmatpush1.bf16.msra.mxu0 %v1121
        %1135 = vmatprep.subr.bf16.mxu0 0
        %1136 = vmatpush1.bf16.msra.mxu0 %v1120
        %1137 = vmatprep.subr.bf16.mxu0 0
        %1138 = vmatpush1.bf16.msra.mxu0 %v1119
        %1139 = vmatprep.subr.bf16.mxu0 0
        %1140 = vmatpush1.bf16.msra.mxu0 %v1118
        %1141 = vmatprep.subr.bf16.mxu0 0
        %1142 = vmatpush1.bf16.msra.mxu0 %v1117
        %1143 = vmatprep.subr.bf16.mxu0 0
        %1144 = vmatpush1.bf16.msra.mxu0 %v1116
        %1145 = vmatprep.subr.bf16.mxu0 0
        %1146 = vmatpush1.bf16.msra.mxu0 %v1115
        %1147 = vmatprep.subr.bf16.mxu0 0
        %1148 = vmatpush2.bf16.msra.mxu0 0
        %1149 = vmatprep.subr.bf16.mxu0 0
        %1150 = vmatpush2.bf16.msra.mxu0 0
        %1151 = vmatprep.subr.bf16.mxu0 0
        %1152 = vmatpush2.bf16.msra.mxu0 0
        %1153 = vmatprep.subr.bf16.mxu0 0
        %1154 = vmatpush2.bf16.msra.mxu0 0
        %1155 = vmatprep.subr.bf16.mxu0 0
        %1156 = vmatpush2.bf16.msra.mxu0 0
        %1157 = vmatprep.subr.bf16.mxu0 0
        %1158 = vmatpush2.bf16.msra.mxu0 0
        %1159 = vmatprep.subr.bf16.mxu0 0
        %1160 = vmatpush2.bf16.msra.mxu0 0
        %1161 = vmatprep.subr.bf16.mxu0 0
        %1162 = vmatpush2.bf16.msra.mxu0 0
        %1163 = vmatprep.mubr.bf16.mxu0 0
        %1164 = vmatmul.mubr.bf16.gmra.mxu0 %v1050
        %v1165 = vpop.f32.mrf.mxu0
        %v1166 = vadd.f32 %v1081, %v1165
        %v1167 = vpop.f32.mrf.mxu0
        %v1168 = vpop.f32.mrf.mxu0
        %v1169 = vadd.f32 %v1081, %v1168
        %v1170 = vpop.f32.mrf.mxu0
        %1171 = vmatprep.mubr.bf16.mxu0 0
        %1172 = vmatmul.mubr.bf16.gmra.mxu0 %v1051
        %v1173 = vpop.f32.mrf.mxu0
        %v1174 = vadd.f32 %v1081, %v1173
        %v1175 = vpop.f32.mrf.mxu0
        %v1176 = vpop.f32.mrf.mxu0
        %v1177 = vadd.f32 %v1081, %v1176
        %v1178 = vpop.f32.mrf.mxu0
        %1179 = vmatprep.mubr.bf16.mxu0 0
        %1180 = vmatmul.mubr.bf16.gmra.mxu0 %v1052
        %v1181 = vpop.f32.mrf.mxu0
        %v1182 = vadd.f32 %v1081, %v1181
        %v1183 = vpop.f32.mrf.mxu0
        %v1184 = vpop.f32.mrf.mxu0
        %v1185 = vadd.f32 %v1081, %v1184
        %v1186 = vpop.f32.mrf.mxu0
        %1187 = vmatprep.mubr.bf16.mxu0 0
        %1188 = vmatmul.mubr.bf16.gmra.mxu0 %v1053
        %v1189 = vpop.f32.mrf.mxu0
        %v1190 = vadd.f32 %v1081, %v1189
        %v1191 = vpop.f32.mrf.mxu0
        %v1192 = vpop.f32.mrf.mxu0
        %v1193 = vadd.f32 %v1081, %v1192
        %v1194 = vpop.f32.mrf.mxu0
        %1195 = vmatprep.mubr.bf16.mxu0 0
        %1196 = vmatmul.mubr.bf16.gmra.mxu0 %v1054
        %v1197 = vpop.f32.mrf.mxu0
        %v1198 = vadd.f32 %v1081, %v1197
        %v1199 = vpop.f32.mrf.mxu0
        %v1200 = vpop.f32.mrf.mxu0
        %v1201 = vadd.f32 %v1081, %v1200
        %v1202 = vpop.f32.mrf.mxu0
        %1203 = vmatprep.mubr.bf16.mxu0 0
        %1204 = vmatmul.mubr.bf16.gmra.mxu0 %v1055
        %v1205 = vpop.f32.mrf.mxu0
        %v1206 = vadd.f32 %v1081, %v1205
        %v1207 = vpop.f32.mrf.mxu0
        %v1208 = vpop.f32.mrf.mxu0
        %v1209 = vadd.f32 %v1081, %v1208
        %v1210 = vpop.f32.mrf.mxu0
        %1211 = vmatprep.mubr.bf16.mxu0 0
        %1212 = vmatmul.mubr.bf16.gmra.mxu0 %v1056
        %v1213 = vpop.f32.mrf.mxu0
        %v1214 = vadd.f32 %v1081, %v1213
        %v1215 = vpop.f32.mrf.mxu0
        %v1216 = vpop.f32.mrf.mxu0
        %v1217 = vadd.f32 %v1081, %v1216
        %v1218 = vpop.f32.mrf.mxu0
        %1219 = vmatprep.mubr.bf16.mxu0 0
        %1220 = vmatmul.mubr.bf16.gmra.mxu0 %v1057
        %v1221 = vpop.f32.mrf.mxu0
        %v1222 = vadd.f32 %v1081, %v1221
        %v1223 = vpop.f32.mrf.mxu0
        %v1224 = vpop.f32.mrf.mxu0
        %v1225 = vadd.f32 %v1081, %v1224
        %v1226 = vpop.f32.mrf.mxu0
        %1227 = vdwg.mxu0
        %v1228 = vmax.f32 %v1166, 0.0
        %v1229 = vmax.f32 %v1169, 0.0
        %v1230 = vmax.f32 %v1174, 0.0
        %v1231 = vmax.f32 %v1177, 0.0
        %v1232 = vmax.f32 %v1182, 0.0
        %v1233 = vmax.f32 %v1185, 0.0
        %v1234 = vmax.f32 %v1190, 0.0
        %v1235 = vmax.f32 %v1193, 0.0
        %v1236 = vmax.f32 %v1198, 0.0
        %v1237 = vmax.f32 %v1201, 0.0
        %v1238 = vmax.f32 %v1206, 0.0
        %v1239 = vmax.f32 %v1209, 0.0
        %v1240 = vmax.f32 %v1214, 0.0
        %v1241 = vmax.f32 %v1217, 0.0
        %v1242 = vmax.f32 %v1222, 0.0
        %v1243 = vmax.f32 %v1225, 0.0
        %v1244 = vpack.c.bf16 %v1229, %v1228
        %v1245 = vpack.c.bf16 %v1231, %v1230
        %v1246 = vpack.c.bf16 %v1233, %v1232
        %v1247 = vpack.c.bf16 %v1235, %v1234
        %v1248 = vpack.c.bf16 %v1237, %v1236
        %v1249 = vpack.c.bf16 %v1239, %v1238
        %v1250 = vpack.c.bf16 %v1241, %v1240
        %v1251 = vpack.c.bf16 %v1243, %v1242
        %s1252 = scalar_lea.vmem [#allocation5], 320
        %v1253 = vld [vmem:[%s1252] sm:$0xf]
        %v1254 = vld [vmem:[%s1252 + $0x4] sm:$0xf]
        %v1255 = vld [vmem:[%s1252 + $0x8] sm:$0xf]
        %v1256 = vld [vmem:[%s1252 + $0xc] sm:$0xf]
        %v1257 = vld [vmem:[%s1252 + $0x10] sm:$0xf]
        %v1258 = vld [vmem:[%s1252 + $0x14] sm:$0xf]
        %v1259 = vld [vmem:[%s1252 + $0x18] sm:$0xf]
        %v1260 = vld [vmem:[%s1252 + $0x1c] sm:$0xf]
        %v1261 = vld [vmem:[%s1252 + $0x20] sm:$0xf]
        %v1262 = vld [vmem:[%s1252 + $0x24] sm:$0xf]
        %v1263 = vld [vmem:[%s1252 + $0x28] sm:$0xf]
        %v1264 = vld [vmem:[%s1252 + $0x2c] sm:$0xf]
        %v1265 = vld [vmem:[%s1252 + $0x30] sm:$0xf]
        %v1266 = vld [vmem:[%s1252 + $0x34] sm:$0xf]
        %v1267 = vld [vmem:[%s1252 + $0x38] sm:$0xf]
        %v1268 = vld [vmem:[%s1252 + $0x3c] sm:$0xf]
        %s1269 = scalar_lea.vmem [#allocation7], 5
        %v1270 = vld [vmem:[%s1269] sm:$0x1]
        %v1272 = vlaneseq
        %v1273 = vshrl.u32 %v1272, 7
        %v1274 = vsub.s32 0, %v1273
        %v1275 = vrot.slane %v1270, %v1274
        %v1293 = vunpack.c.l.b16 %v1253
        %v1294 = vunpack.c.l.b16 %v1254
        %v1295 = vunpack.c.l.b16 %v1255
        %v1296 = vunpack.c.l.b16 %v1256
        %v1297 = vunpack.c.l.b16 %v1257
        %v1298 = vunpack.c.l.b16 %v1258
        %v1299 = vunpack.c.l.b16 %v1259
        %v1300 = vunpack.c.l.b16 %v1260
        %v1301 = vunpack.c.l.b16 %v1261
        %v1302 = vunpack.c.l.b16 %v1262
        %v1303 = vunpack.c.l.b16 %v1263
        %v1304 = vunpack.c.l.b16 %v1264
        %v1305 = vunpack.c.l.b16 %v1265
        %v1306 = vunpack.c.l.b16 %v1266
        %v1307 = vunpack.c.l.b16 %v1267
        %v1308 = vunpack.c.l.b16 %v1268
        %v1309 = vpack.c.b16 %v1294, %v1293
        %v1310 = vpack.c.b16 %v1296, %v1295
        %v1311 = vpack.c.b16 %v1298, %v1297
        %v1312 = vpack.c.b16 %v1300, %v1299
        %v1313 = vpack.c.b16 %v1302, %v1301
        %v1314 = vpack.c.b16 %v1304, %v1303
        %v1315 = vpack.c.b16 %v1306, %v1305
        %v1316 = vpack.c.b16 %v1308, %v1307
        %1325 = vmatprep.subr.bf16.mxu0 0
        %1326 = vmatpush1.bf16.msra.mxu0 %v1316
        %1327 = vmatprep.subr.bf16.mxu0 0
        %1328 = vmatpush1.bf16.msra.mxu0 %v1315
        %1329 = vmatprep.subr.bf16.mxu0 0
        %1330 = vmatpush1.bf16.msra.mxu0 %v1314
        %1331 = vmatprep.subr.bf16.mxu0 0
        %1332 = vmatpush1.bf16.msra.mxu0 %v1313
        %1333 = vmatprep.subr.bf16.mxu0 0
        %1334 = vmatpush1.bf16.msra.mxu0 %v1312
        %1335 = vmatprep.subr.bf16.mxu0 0
        %1336 = vmatpush1.bf16.msra.mxu0 %v1311
        %1337 = vmatprep.subr.bf16.mxu0 0
        %1338 = vmatpush1.bf16.msra.mxu0 %v1310
        %1339 = vmatprep.subr.bf16.mxu0 0
        %1340 = vmatpush1.bf16.msra.mxu0 %v1309
        %1341 = vmatprep.subr.bf16.mxu0 0
        %1342 = vmatpush2.bf16.msra.mxu0 0
        %1343 = vmatprep.subr.bf16.mxu0 0
        %1344 = vmatpush2.bf16.msra.mxu0 0
        %1345 = vmatprep.subr.bf16.mxu0 0
        %1346 = vmatpush2.bf16.msra.mxu0 0
        %1347 = vmatprep.subr.bf16.mxu0 0
        %1348 = vmatpush2.bf16.msra.mxu0 0
        %1349 = vmatprep.subr.bf16.mxu0 0
        %1350 = vmatpush2.bf16.msra.mxu0 0
        %1351 = vmatprep.subr.bf16.mxu0 0
        %1352 = vmatpush2.bf16.msra.mxu0 0
        %1353 = vmatprep.subr.bf16.mxu0 0
        %1354 = vmatpush2.bf16.msra.mxu0 0
        %1355 = vmatprep.subr.bf16.mxu0 0
        %1356 = vmatpush2.bf16.msra.mxu0 0
        %1357 = vmatprep.mubr.bf16.mxu0 0
        %1358 = vmatmul.mubr.bf16.gmra.mxu0 %v1244
        %v1359 = vpop.f32.mrf.mxu0
        %v1360 = vadd.f32 %v1275, %v1359
        %v1361 = vpop.f32.mrf.mxu0
        %v1362 = vpop.f32.mrf.mxu0
        %v1363 = vadd.f32 %v1275, %v1362
        %v1364 = vpop.f32.mrf.mxu0
        %1365 = vmatprep.mubr.bf16.mxu0 0
        %1366 = vmatmul.mubr.bf16.gmra.mxu0 %v1245
        %v1367 = vpop.f32.mrf.mxu0
        %v1368 = vadd.f32 %v1275, %v1367
        %v1369 = vpop.f32.mrf.mxu0
        %v1370 = vpop.f32.mrf.mxu0
        %v1371 = vadd.f32 %v1275, %v1370
        %v1372 = vpop.f32.mrf.mxu0
        %1373 = vmatprep.mubr.bf16.mxu0 0
        %1374 = vmatmul.mubr.bf16.gmra.mxu0 %v1246
        %v1375 = vpop.f32.mrf.mxu0
        %v1376 = vadd.f32 %v1275, %v1375
        %v1377 = vpop.f32.mrf.mxu0
        %v1378 = vpop.f32.mrf.mxu0
        %v1379 = vadd.f32 %v1275, %v1378
        %v1380 = vpop.f32.mrf.mxu0
        %1381 = vmatprep.mubr.bf16.mxu0 0
        %1382 = vmatmul.mubr.bf16.gmra.mxu0 %v1247
        %v1383 = vpop.f32.mrf.mxu0
        %v1384 = vadd.f32 %v1275, %v1383
        %v1385 = vpop.f32.mrf.mxu0
        %v1386 = vpop.f32.mrf.mxu0
        %v1387 = vadd.f32 %v1275, %v1386
        %v1388 = vpop.f32.mrf.mxu0
        %1389 = vmatprep.mubr.bf16.mxu0 0
        %1390 = vmatmul.mubr.bf16.gmra.mxu0 %v1248
        %v1391 = vpop.f32.mrf.mxu0
        %v1392 = vadd.f32 %v1275, %v1391
        %v1393 = vpop.f32.mrf.mxu0
        %v1394 = vpop.f32.mrf.mxu0
        %v1395 = vadd.f32 %v1275, %v1394
        %v1396 = vpop.f32.mrf.mxu0
        %1397 = vmatprep.mubr.bf16.mxu0 0
        %1398 = vmatmul.mubr.bf16.gmra.mxu0 %v1249
        %v1399 = vpop.f32.mrf.mxu0
        %v1400 = vadd.f32 %v1275, %v1399
        %v1401 = vpop.f32.mrf.mxu0
        %v1402 = vpop.f32.mrf.mxu0
        %v1403 = vadd.f32 %v1275, %v1402
        %v1404 = vpop.f32.mrf.mxu0
        %1405 = vmatprep.mubr.bf16.mxu0 0
        %1406 = vmatmul.mubr.bf16.gmra.mxu0 %v1250
        %v1407 = vpop.f32.mrf.mxu0
        %v1408 = vadd.f32 %v1275, %v1407
        %v1409 = vpop.f32.mrf.mxu0
        %v1410 = vpop.f32.mrf.mxu0
        %v1411 = vadd.f32 %v1275, %v1410
        %v1412 = vpop.f32.mrf.mxu0
        %1413 = vmatprep.mubr.bf16.mxu0 0
        %1414 = vmatmul.mubr.bf16.gmra.mxu0 %v1251
        %v1415 = vpop.f32.mrf.mxu0
        %v1416 = vadd.f32 %v1275, %v1415
        %v1417 = vpop.f32.mrf.mxu0
        %v1418 = vpop.f32.mrf.mxu0
        %v1419 = vadd.f32 %v1275, %v1418
        %v1420 = vpop.f32.mrf.mxu0
        %1421 = vdwg.mxu0
        %v1422 = vsub.f32 0.0, %v1360
        %v1423 = vsub.f32 0.0, %v1363
        %v1424 = vsub.f32 0.0, %v1368
        %v1425 = vsub.f32 0.0, %v1371
        %v1426 = vsub.f32 0.0, %v1376
        %v1427 = vsub.f32 0.0, %v1379
        %v1428 = vsub.f32 0.0, %v1384
        %v1429 = vsub.f32 0.0, %v1387
        %v1430 = vsub.f32 0.0, %v1392
        %v1431 = vsub.f32 0.0, %v1395
        %v1432 = vsub.f32 0.0, %v1400
        %v1433 = vsub.f32 0.0, %v1403
        %v1434 = vsub.f32 0.0, %v1408
        %v1435 = vsub.f32 0.0, %v1411
        %v1436 = vsub.f32 0.0, %v1416
        %v1437 = vsub.f32 0.0, %v1419
        %v1438 = vmul.f32 %v1422, 1.442695
        %v1439 = vpow.pop %v1438
        %v1440 = vmul.f32 %v1423, 1.442695
        %v1441 = vpow.pop %v1440
        %v1442 = vmul.f32 %v1424, 1.442695
        %v1443 = vpow.pop %v1442
        %v1444 = vmul.f32 %v1425, 1.442695
        %v1445 = vpow.pop %v1444
        %v1446 = vmul.f32 %v1426, 1.442695
        %v1447 = vpow.pop %v1446
        %v1448 = vmul.f32 %v1427, 1.442695
        %v1449 = vpow.pop %v1448
        %v1450 = vmul.f32 %v1428, 1.442695
        %v1451 = vpow.pop %v1450
        %v1452 = vmul.f32 %v1429, 1.442695
        %v1453 = vpow.pop %v1452
        %v1454 = vmul.f32 %v1430, 1.442695
        %v1455 = vpow.pop %v1454
        %v1456 = vmul.f32 %v1431, 1.442695
        %v1457 = vpow.pop %v1456
        %v1458 = vmul.f32 %v1432, 1.442695
        %v1459 = vpow.pop %v1458
        %v1460 = vmul.f32 %v1433, 1.442695
        %v1461 = vpow.pop %v1460
        %v1462 = vmul.f32 %v1434, 1.442695
        %v1463 = vpow.pop %v1462
        %v1464 = vmul.f32 %v1435, 1.442695
        %v1465 = vpow.pop %v1464
        %v1466 = vmul.f32 %v1436, 1.442695
        %v1467 = vpow.pop %v1466
        %v1468 = vmul.f32 %v1437, 1.442695
        %v1469 = vpow.pop %v1468
        %v1470 = vadd.f32 %v1439, 1.0
        %v1471 = vadd.f32 %v1441, 1.0
        %v1472 = vadd.f32 %v1443, 1.0
        %v1473 = vadd.f32 %v1445, 1.0
        %v1474 = vadd.f32 %v1447, 1.0
        %v1475 = vadd.f32 %v1449, 1.0
        %v1476 = vadd.f32 %v1451, 1.0
        %v1477 = vadd.f32 %v1453, 1.0
        %v1478 = vadd.f32 %v1455, 1.0
        %v1479 = vadd.f32 %v1457, 1.0
        %v1480 = vadd.f32 %v1459, 1.0
        %v1481 = vadd.f32 %v1461, 1.0
        %v1482 = vadd.f32 %v1463, 1.0
        %v1483 = vadd.f32 %v1465, 1.0
        %v1484 = vadd.f32 %v1467, 1.0
        %v1485 = vadd.f32 %v1469, 1.0
        %v1486 = vrcp.pop %v1470
        %v1487 = vrcp.pop %v1471
        %v1488 = vrcp.pop %v1472
        %v1489 = vrcp.pop %v1473
        %v1490 = vrcp.pop %v1474
        %v1491 = vrcp.pop %v1475
        %v1492 = vrcp.pop %v1476
        %v1493 = vrcp.pop %v1477
        %v1494 = vrcp.pop %v1478
        %v1495 = vrcp.pop %v1479
        %v1496 = vrcp.pop %v1480
        %v1497 = vrcp.pop %v1481
        %v1498 = vrcp.pop %v1482
        %v1499 = vrcp.pop %v1483
        %v1500 = vrcp.pop %v1484
        %v1501 = vrcp.pop %v1485
        %1502 = vst [vmem:[%s248] sm:$0xff] %v1486
        %1503 = vst [vmem:[%s248 + $0x8] sm:$0xff] %v1487
        %1504 = vst [vmem:[%s248 + $0x10] sm:$0xff] %v1488
        %1505 = vst [vmem:[%s248 + $0x18] sm:$0xff] %v1489
        %1506 = vst [vmem:[%s248 + $0x20] sm:$0xff] %v1490
        %1507 = vst [vmem:[%s248 + $0x28] sm:$0xff] %v1491
        %1508 = vst [vmem:[%s248 + $0x30] sm:$0xff] %v1492
        %1509 = vst [vmem:[%s248 + $0x38] sm:$0xff] %v1493
        %1510 = vst [vmem:[%s248 + $0x40] sm:$0xff] %v1494
        %1511 = vst [vmem:[%s248 + $0x48] sm:$0xff] %v1495
        %1512 = vst [vmem:[%s248 + $0x50] sm:$0xff] %v1496
        %1513 = vst [vmem:[%s248 + $0x58] sm:$0xff] %v1497
        %1514 = vst [vmem:[%s248 + $0x60] sm:$0xff] %v1498
        %1515 = vst [vmem:[%s248 + $0x68] sm:$0xff] %v1499
        %1516 = vst [vmem:[%s248 + $0x70] sm:$0xff] %v1500
        %1517 = vst [vmem:[%s248 + $0x78] sm:$0xff] %v1501
        %s1518 = sand.u32 %s102, 1
        %s1519 = scalar_lea.sflag [#allocation4], %s1518
        %s1520 = sand.u32 %s102, 1
        %s1521 = smul.addr %s1520, 128
        %s1522 = scalar_lea.vmem [#allocation8], %s1521
        %s1523 = sand.u32 %s128, 1
        %s1524 = scalar_lea.sflag [#allocation10], %s1523
        %s1525 = sand.u32 %s128, 1
        %s1526 = smul.addr %s1525, 128
        %s1527 = scalar_lea.vmem [#allocation9], %s1526
        // Predicated region
        $region45: #{tpu_custom_call.1} parent=31 // pred_check
          %p1528 = pneg %p112
        $region46: #{tpu_custom_call.1} parent=31 // pred_check_branch
          %1530 = sbr.rel (%p1528) target = $region48
        $region47: #{tpu_custom_call.1} parent=31 // pred_region
          %s1531 = smul.u32 16, %s26
          %s1533 = ssub.s32 2048, 2048
          %1534 = vsyncadd %s1519, %s1533
          %s1535 = smul.addr %s1531, 128
          %s1536 = scalar_lea.hbm %s3, %s1535
          %s1537 = sshll.u32 %s1522, 4
          %s1538 = int_to_ptr.vmem [resolvable:$true] %s1537
          %1543 = dma.vmem_to_hbm [thread:$0]  %s1538, 2048, %s1536, %s1519, 128, 128, 8
        $region48: #{tpu_custom_call.1} parent=31 // pred_fallthru
          _
        // Predicated region
        $region49: #{tpu_custom_call.1} parent=31 // pred_check
          %p1544 = pneg %p138
        $region50: #{tpu_custom_call.1} parent=31 // pred_check_branch
          %1546 = sbr.rel (%p1544) target = $region52
        $region51: #{tpu_custom_call.1} parent=31 // pred_region
          %s1547 = smul.u32 16, %s26
          %s1549 = ssub.s32 2048, 2048
          %1550 = vsyncadd %s1524, %s1549
          %s1551 = smul.addr %s1547, 128
          %s1552 = scalar_lea.hbm %s4, %s1551
          %s1553 = sshll.u32 %s1527, 4
          %s1554 = int_to_ptr.vmem [resolvable:$true] %s1553
          %1559 = dma.vmem_to_hbm [thread:$0]  %s1554, 2048, %s1552, %s1524, 128, 128, 8
        $region52: #{tpu_custom_call.1} parent=31 // pred_fallthru
          _
      $region32: #{tpu_custom_call.1} parent=5 // pred_fallthru
        _
      %p1560 = scmp.le.s32.totalorder 2, %s21
      // Predicated region
      $region53: #{tpu_custom_call.1} parent=5 // pred_check
        %p1561 = pneg %p1560
      $region54: #{tpu_custom_call.1} parent=5 // pred_check_branch
        %1563 = sbr.rel (%p1561) target = $region56
      $region55: #{tpu_custom_call.1} parent=5 // pred_region
        %s1564 = ssub.s32 %s21, 2
        // Predicated region
        $region57: #{tpu_custom_call.1} parent=55 // pred_check
          %p1565 = pneg %p118
        $region58: #{tpu_custom_call.1} parent=55 // pred_check_branch
          %1567 = sbr.rel (%p1565) target = $region60
        $region59: #{tpu_custom_call.1} parent=55 // pred_region
          %s1568 = sand.u32 %s103, 1
          %s1569 = scalar_lea.sflag [#allocation4], %s1568
          %s1570 = sand.u32 %s103, 1
          %s1571 = smul.addr %s1570, 128
          %s1572 = scalar_lea.vmem [#allocation8], %s1571
          %1573 = dma.done %s1569, 2048
        $region60: #{tpu_custom_call.1} parent=55 // pred_fallthru
          _
        // Predicated region
        $region61: #{tpu_custom_call.1} parent=55 // pred_check
          %p1574 = pneg %p144
        $region62: #{tpu_custom_call.1} parent=55 // pred_check_branch
          %1576 = sbr.rel (%p1574) target = $region64
        $region63: #{tpu_custom_call.1} parent=55 // pred_region
          %s1577 = sand.u32 %s129, 1
          %s1578 = scalar_lea.sflag [#allocation10], %s1577
          %s1579 = sand.u32 %s129, 1
          %s1580 = smul.addr %s1579, 128
          %s1581 = scalar_lea.vmem [#allocation9], %s1580
          %1582 = dma.done %s1578, 2048
        $region64: #{tpu_custom_call.1} parent=55 // pred_fallthru
          _
      $region56: #{tpu_custom_call.1} parent=5 // pred_fallthru
        _
    $region6: #{tpu_custom_call.1} parent=1 // loop_footer
      %s25 = sadd.s32 1, %s21
    $region7: #{tpu_custom_call.1} parent=1 // loop_footer_branch
      %20 = sbr.rel target = $region3
    $region8: #{tpu_custom_call.1} parent=1 // loop_exit
      _
    %1583 = vsyncpa [#allocation3], 1
    %s1584 = scalar_lea.sflag [#allocation3], 1
    %1585 = vsyncpa %s1584, 1
    %1586 = vsyncpa [#allocation6], 1
    %1587 = vsyncpa [#allocation4], 1
    %s1588 = scalar_lea.sflag [#allocation4], 1
    %1589 = vsyncpa %s1588, 1
    %1590 = vsyncpa [#allocation10], 1
    %s1591 = scalar_lea.sflag [#allocation10], 1
    %1592 = vsyncpa %s1591, 1

</llo_original>
